<compile_context>
chip_gen: v7x
topology: tpu7x:2x2x1
jax: 0.10.0
libtpu: 0.0.40
codegen_flags: <defaults>
</compile_context>

<pallas_src>
import functools
import math

import jax
import jax.numpy as jnp
from jax import lax
from jax.experimental import pallas as pl
from jax.experimental.pallas import tpu as pltpu

TILE_N = 512                      # row-tile target (v5e/v6e); capped per problem
TILE_V = 2048                     # vocab-tile width for the nrm head
NEG_BIG = -1e30                   # "minus infinity" bias for pad columns
LOG_EPS = math.log(1e-12)         # floor matching torch.log(softmax + 1e-12)


def _round_up(x, m):
    return -(-x // m) * m


def _vmem_limit_bytes():
    # Generation-aware scoped-VMEM limit: ~75% of physical capacity
    # (~96 MiB on v5e/v6e, ~48 MiB on v7x); conservative fallback otherwise.
    cap = None
    try:
        cap = getattr(pltpu.get_tpu_info(), "vmem_capacity_bytes", None)
    except Exception:
        cap = None
    if not cap:
        cap = 64 * 1024 * 1024
    return (int(cap) * 3) // 4


VMEM_LIMIT = _vmem_limit_bytes()


def _pick_tile_n(n, target=TILE_N):
    """Row tile: target for big N; >=2 tiles for small N (v7x has 2 TCs)."""
    n8 = _round_up(n, 8)
    if n8 >= 2 * target:
        return target
    return max(8, _round_up(pl.cdiv(n8, 2), 8))


def _vocab_tiling(nwrd):
    tile_v = min(TILE_V, _round_up(nwrd + 1, 128))
    v_pad = _round_up(nwrd + 1, tile_v)
    return tile_v, v_pad


# ----------------------------------------------------------------------------
# Pallas kernel: tiled linear  y = x @ W + b   (bf16 MXU inputs, f32 accum)
# ----------------------------------------------------------------------------
def _linear_kernel(x_ref, w_ref, b_ref, o_ref):
    x = x_ref[...].astype(jnp.bfloat16)
    o_ref[...] = (
        jnp.dot(x, w_ref[...], preferred_element_type=jnp.float32) + b_ref[...]
    ).astype(o_ref.dtype)


def pallas_linear(x, w, b):
    n, k = x.shape
    m = w.shape[1]
    tile_n = _pick_tile_n(n)
    nr = pl.cdiv(n, tile_n)
    return pl.pallas_call(
        _linear_kernel,
        out_shape=jax.ShapeDtypeStruct((n, m), jnp.float32),
        grid_spec=pltpu.PrefetchScalarGridSpec(
            num_scalar_prefetch=0,
            grid=(nr,),
            in_specs=[
                pl.BlockSpec((tile_n, k), lambda i: (i, 0)),
                pl.BlockSpec((k, m), lambda i: (0, 0)),
                pl.BlockSpec((1, m), lambda i: (0, 0)),
            ],
            out_specs=pl.BlockSpec((tile_n, m), lambda i: (i, 0)),
        ),
        compiler_params=pltpu.CompilerParams(
            dimension_semantics=("parallel",),
            vmem_limit_bytes=VMEM_LIMIT,
        ),
    )(x, w, b)


# ----------------------------------------------------------------------------
# Pallas kernel: masked bidirectional LSTM recurrence.
# grid = (2,): one direction per grid step ("parallel" -> one TC each on v7x).
# w_hh stays resident in VMEM; h/c state lives in VMEM scratch; time loop is a
# lax.fori_loop; the backward direction walks time in reverse and writes its
# outputs at the real time index, so no host-side flips are needed.
# ----------------------------------------------------------------------------
def _bidir_lstm_kernel(gx_ref, m_ref, whh_ref, hout_ref, h_scr, c_scr):
    # gx_ref: (ls, 4, bs, h)  gate-major pre-activations (input projection)
    # m_ref:  (ls, bs, 1)     sequence mask
    # whh_ref:(4, h, h)       recurrent weights, gate-major
    # hout_ref:(ls, bs, h)    hidden states out
    d = pl.program_id(0)
    ls = gx_ref.shape[0]

    h_scr[...] = jnp.zeros_like(h_scr)
    c_scr[...] = jnp.zeros_like(c_scr)
    whh = whh_ref[...].astype(jnp.bfloat16)          # (4, h, h), VMEM-resident

    def step(t, carry):
        tt = jnp.where(d == 0, t, ls - 1 - t)        # fwd: 0..ls-1, bwd: reversed
        h_prev = h_scr[...]
        c_prev = c_scr[...]
        hp_bf = h_prev.astype(jnp.bfloat16)
        gxt = gx_ref[tt]                             # (4, bs, h) f32
        gates = [
            gxt[j] + jnp.dot(hp_bf, whh[j], preferred_element_type=jnp.float32)
            for j in range(4)
        ]
        i_g = jax.nn.sigmoid(gates[0])
        f_g = jax.nn.sigmoid(gates[1])
        g_g = jnp.tanh(gates[2])
        o_g = jax.nn.sigmoid(gates[3])
        c_new = f_g * c_prev + i_g * g_g
        h_new = o_g * jnp.tanh(c_new)
        msk = m_ref[tt]                              # (bs, 1)
        h_cur = msk * h_new + (1.0 - msk) * h_prev
        c_cur = msk * c_new + (1.0 - msk) * c_prev
        h_scr[...] = h_cur
        c_scr[...] = c_cur
        hout_ref[tt] = h_cur
        return carry

    lax.fori_loop(0, ls, step, 0)


def pallas_bidir_lstm(gx, mask_t, w_hh):
    # gx: (2, ls, 4, bs, h) f32; mask_t: (ls, bs, 1) f32; w_hh: (2, 4, h, h) f32
    _, ls, _, bs, h = gx.shape
    return pl.pallas_call(
        _bidir_lstm_kernel,
        out_shape=jax.ShapeDtypeStruct((2, ls, bs, h), jnp.float32),
        grid_spec=pltpu.PrefetchScalarGridSpec(
            num_scalar_prefetch=0,
            grid=(2,),
            in_specs=[
                pl.BlockSpec((None, ls, 4, bs, h), lambda d: (d, 0, 0, 0, 0)),
                pl.BlockSpec((ls, bs, 1), lambda d: (0, 0, 0)),
                pl.BlockSpec((None, 4, h, h), lambda d: (d, 0, 0, 0)),
            ],
            out_specs=pl.BlockSpec((None, ls, bs, h), lambda d: (d, 0, 0, 0)),
            scratch_shapes=[
                pltpu.VMEM((bs, h), jnp.float32),    # h state
                pltpu.VMEM((bs, h), jnp.float32),    # c state
            ],
        ),
        compiler_params=pltpu.CompilerParams(
            dimension_semantics=("parallel",),
            vmem_limit_bytes=VMEM_LIMIT,
        ),
    )(gx, mask_t, w_hh)


# ----------------------------------------------------------------------------
# Pallas kernels: fused generator head, vocab-tiled with online softmax.
# Pass 1 (grid = rows x vocab_tiles):
#   - one fused matmul over [w_spt_pad | w_cpy] at v==0 -> spt log-probs (final)
#     + copy logit (kept in scratch and folded into the online denominator)
#   - streamed (hs, TILE_V) w_nrm tiles -> raw logits written per tile,
#     running max / denom in scratch, log-normalizer written at v==last,
#     copy logit injected lane-dense at column nwrd of the last tile.
# Pass 2 (epilogue, aliased in place): logprob = max(logit - lognorm, LOG_EPS).
# ----------------------------------------------------------------------------
def _head_pass_kernel(ctx_ref, wnrm_ref, bnrm_ref, wsc_ref, bsc_ref,
                      pspt_ref, pnrm_ref, stat_ref,
                      m_scr, l_scr, pcpy_scr, *, spt_pad, copy_col):
    v = pl.program_id(1)
    nv = pl.num_programs(1)

    ctx = ctx_ref[...]                                # (TILE_N, hs) f32
    ctx_bf = ctx.astype(jnp.bfloat16)
    logits = (jnp.dot(ctx_bf, wnrm_ref[...], preferred_element_type=jnp.float32)
              + bnrm_ref[...])                        # (TILE_N, TILE_V) f32

    @pl.when(v == 0)
    def _():
        # fused [spt | copy] projection; pad spt columns carry bias -1e30.
        sc = (jnp.dot(ctx_bf, wsc_ref[...], preferred_element_type=jnp.float32)
              + bsc_ref[...])
        spt_logit = sc[:, :spt_pad]
        cpy_hx = sc[:, spt_pad:]
        pcpy = jnp.sum(cpy_hx * ctx, axis=-1, keepdims=True)      # f32 reduction
        pcpy_scr[...] = pcpy

        # spt head: its softmax is over its own (padded) columns only -> final.
        m_s = jnp.max(spt_logit, axis=-1, keepdims=True)
        den_s = jnp.sum(jnp.exp(spt_logit - m_s), axis=-1, keepdims=True)
        pspt_ref[...] = jnp.maximum(spt_logit - m_s - jnp.log(den_s), LOG_EPS)

        # init online softmax stats with this vocab tile + the copy logit.
        m0 = jnp.maximum(jnp.max(logits, axis=-1, keepdims=True), pcpy)
        l_scr[...] = (jnp.sum(jnp.exp(logits - m0), axis=-1, keepdims=True)
                      + jnp.exp(pcpy - m0))
        m_scr[...] = m0

    @pl.when(v > 0)
    def _():
        m_prev = m_scr[...]
        m_new = jnp.maximum(m_prev, jnp.max(logits, axis=-1, keepdims=True))
        l_scr[...] = (l_scr[...] * jnp.exp(m_prev - m_new)
                      + jnp.sum(jnp.exp(logits - m_new), axis=-1, keepdims=True))
        m_scr[...] = m_new

    @pl.when(v < nv - 1)
    def _():
        pnrm_ref[...] = logits

    @pl.when(v == nv - 1)
    def _():
        # lane-dense full-tile store; copy logit injected at its column.
        lane = lax.broadcasted_iota(jnp.int32, logits.shape, 1)
        pnrm_ref[...] = jnp.where(lane == copy_col, pcpy_scr[...], logits)
        stat_ref[...] = m_scr[...] + jnp.log(l_scr[...])


def _lognorm_kernel(logit_ref, stat_ref, out_ref):
    out_ref[...] = jnp.maximum(logit_ref[...] - stat_ref[...], LOG_EPS)


def pallas_head(ctx_flat, w_nrm_pad, b_nrm_pad, w_spt_cpy, b_spt_cpy, nwrd):
    n, hs = ctx_flat.shape
    tile_v, v_pad = _vocab_tiling(nwrd)
    assert w_nrm_pad.shape[1] == v_pad
    spt_pad = w_spt_cpy.shape[1] - hs
    nv = v_pad // tile_v
    tile_n = _pick_tile_n(n)
    nr = pl.cdiv(n, tile_n)
    copy_col = nwrd - (nv - 1) * tile_v               # copy column is in last tile

    kernel = functools.partial(_head_pass_kernel, spt_pad=spt_pad,
                               copy_col=copy_col)
    pspt, pnrm_logits, stats = pl.pallas_call(
        kernel,
        out_shape=(
            jax.ShapeDtypeStruct((n, spt_pad), jnp.float32),
            jax.ShapeDtypeStruct((n, v_pad), jnp.float32),
            jax.ShapeDtypeStruct((n, 1), jnp.float32),
        ),
        grid_spec=pltpu.PrefetchScalarGridSpec(
            num_scalar_prefetch=0,
            grid=(nr, nv),
            in_specs=[
                pl.BlockSpec((tile_n, hs), lambda i, v: (i, 0)),
                pl.BlockSpec((hs, tile_v), lambda i, v: (0, v)),
                pl.BlockSpec((1, tile_v), lambda i, v: (0, v)),
                pl.BlockSpec((hs, spt_pad + hs), lambda i, v: (0, 0)),
                pl.BlockSpec((1, spt_pad + hs), lambda i, v: (0, 0)),
            ],
            out_specs=(
                pl.BlockSpec((tile_n, spt_pad), lambda i, v: (i, 0)),
                pl.BlockSpec((tile_n, tile_v), lambda i, v: (i, v)),
                pl.BlockSpec((tile_n, 1), lambda i, v: (i, 0)),
            ),
            scratch_shapes=[
                pltpu.VMEM((tile_n, 1), jnp.float32),   # running max
                pltpu.VMEM((tile_n, 1), jnp.float32),   # running denom
                pltpu.VMEM((tile_n, 1), jnp.float32),   # copy logit
            ],
        ),
        compiler_params=pltpu.CompilerParams(
            dimension_semantics=("parallel", "arbitrary"),
            vmem_limit_bytes=VMEM_LIMIT,
        ),
    )(ctx_flat, w_nrm_pad, b_nrm_pad, w_spt_cpy, b_spt_cpy)

    # element-wise epilogue: normalize in place (aliased with the logits buffer)
    pnrm = pl.pallas_call(
        _lognorm_kernel,
        out_shape=jax.ShapeDtypeStruct((n, v_pad), jnp.float32),
        grid_spec=pltpu.PrefetchScalarGridSpec(
            num_scalar_prefetch=0,
            grid=(nr, nv),
            in_specs=[
                pl.BlockSpec((tile_n, tile_v), lambda i, v: (i, v)),
                pl.BlockSpec((tile_n, 1), lambda i, v: (i, 0)),
            ],
            out_specs=pl.BlockSpec((tile_n, tile_v), lambda i, v: (i, v)),
        ),
        input_output_aliases={0: 0},
        compiler_params=pltpu.CompilerParams(
            dimension_semantics=("parallel", "arbitrary"),
            vmem_limit_bytes=VMEM_LIMIT,
        ),
    )(pnrm_logits, stats)
    return pspt, pnrm


# ----------------------------------------------------------------------------
# Forward pass (eval mode: dropouts are identity, reinforce branch omitted).
# ----------------------------------------------------------------------------
@jax.jit
def seq_copy_generator_forward(inp_word, inp_char, inp_pos, masks, params):
    del inp_char, inp_pos  # TODO(synk): unused — InpEncoder reduced to embedding
    bs, ls = inp_word.shape
    nwrd = params["word_table"].shape[0]
    h = params["w_hh"].shape[-1]

    emb = params["word_table"][inp_word]                  # (bs, ls, word_dim)
    x_flat = emb.reshape(bs * ls, -1)

    # fused bidirectional LSTM input projection (one Pallas matmul)
    gx = pallas_linear(x_flat, params["w_ih"], params["b_ih"])       # (N, 8h)
    gx = jnp.transpose(gx.reshape(bs, ls, 2, 4, h), (2, 1, 3, 0, 4))  # (2,ls,4,bs,h)
    mask_t = jnp.transpose(masks.astype(jnp.float32))[:, :, None]     # (ls, bs, 1)

    # masked bidirectional recurrence, one Pallas kernel, one dir per grid step
    hout = pallas_bidir_lstm(gx, mask_t, params["w_hh"])              # (2,ls,bs,h)
    ctx_flat = jnp.transpose(hout, (2, 1, 0, 3)).reshape(bs * ls, 2 * h)

    # keyword / normal position masks
    spt_idx = (inp_word[..., None] == params["keywords"][None, None, :]).any(-1)
    nrm_idx = jnp.logical_and(jnp.logical_not(spt_idx), masks > 0)

    # generator head (vocab-tiled online softmax + in-place epilogue)
    pspt, pnrm = pallas_head(
        ctx_flat,
        params["w_nrm_pad"], params["b_nrm_pad"],
        params["w_spt_cpy"], params["b_spt_cpy"],
        nwrd,
    )

    return {
        # lane-padded outputs: pspt cols [0, ntgt) valid; pnrm cols [0, nwrd]
        # valid (col nwrd = copy logit); pad columns are clamped to log(1e-12).
        "pspt": pspt,                               # (bs*ls, round_up(ntgt,128))
        "pnrm": pnrm,                               # (bs*ls, round_up(nwrd+1,TILE_V))
        "spt_mask": spt_idx.reshape(-1),
        "nrm_mask": nrm_idx.reshape(-1),
        "nrm_id": inp_word.reshape(-1),             # select with nrm_mask downstream
        "obf_mask": spt_idx.astype(jnp.float32),    # (bs, ls)
    }


# ----------------------------------------------------------------------------
# Parameter construction (all weight fusion / padding done here, outside jit).
# ----------------------------------------------------------------------------
def make_params(key, nwrd, word_dim, ctx_fs, ntgt, keywords):
    hs = 2 * ctx_fs
    _, v_pad = _vocab_tiling(nwrd)
    spt_pad = _round_up(ntgt, 128)
    ks = jax.random.split(key, 13)
    s = 0.1
    bf = jnp.bfloat16

    w_ih_f = s * jax.random.normal(ks[1], (word_dim, 4 * ctx_fs), jnp.float32)
    w_ih_b = s * jax.random.normal(ks[2], (word_dim, 4 * ctx_fs), jnp.float32)
    b_ih_f = s * jax.random.normal(ks[3], (1, 4 * ctx_fs), jnp.float32)
    b_ih_b = s * jax.random.normal(ks[4], (1, 4 * ctx_fs), jnp.float32)
    w_hh_f = s * jax.random.normal(ks[5], (ctx_fs, 4 * ctx_fs), jnp.float32)
    w_hh_b = s * jax.random.normal(ks[6], (ctx_fs, 4 * ctx_fs), jnp.float32)
    w_spt = s * jax.random.normal(ks[7], (hs, ntgt), jnp.float32)
    b_spt = s * jax.random.normal(ks[8], (1, ntgt), jnp.float32)
    w_nrm = s * jax.random.normal(ks[9], (hs, nwrd), jnp.float32)
    b_nrm = s * jax.random.normal(ks[10], (1, nwrd), jnp.float32)
    w_cpy = s * jax.random.normal(ks[11], (hs, hs), jnp.float32)
    b_cpy = s * jax.random.normal(ks[12], (1, hs), jnp.float32)

    # fused LSTM input projection: columns [dir_f(i,f,g,o) | dir_b(i,f,g,o)]
    w_ih = jnp.concatenate([w_ih_f, w_ih_b], axis=1).astype(bf)
    b_ih = jnp.concatenate([b_ih_f, b_ih_b], axis=1)

    # recurrent weights, gate-major: (dir, gate, h, h)
    def gate_major(w):
        return jnp.transpose(w.reshape(ctx_fs, 4, ctx_fs), (1, 0, 2))
    w_hh = jnp.stack([gate_major(w_hh_f), gate_major(w_hh_b)], axis=0)

    # lane-padded nrm head weights; pad / copy-slot columns get bias -1e30 so
    # they carry ~zero probability mass (copy logit is injected in-kernel).
    w_nrm_pad = jnp.zeros((hs, v_pad), jnp.float32).at[:, :nwrd].set(w_nrm).astype(bf)
    b_nrm_pad = jnp.full((1, v_pad), NEG_BIG, jnp.float32).at[:, :nwrd].set(b_nrm)

    # fused [spt (padded to 128-multiple) | copy] projection
    w_spt_cpy = jnp.concatenate(
        [jnp.zeros((hs, spt_pad), jnp.float32).at[:, :ntgt].set(w_spt), w_cpy],
        axis=1).astype(bf)
    b_spt_cpy = jnp.concatenate(
        [jnp.full((1, spt_pad), NEG_BIG, jnp.float32).at[:, :ntgt].set(b_spt), b_cpy],
        axis=1)

    # TODO(synk): for production configs, make word_dim / hs multiples of 128
    #             (MXU alignment) at the model-config level.
    return {
        "word_table": s * jax.random.normal(ks[0], (nwrd, word_dim), jnp.float32),
        "w_ih": w_ih, "b_ih": b_ih, "w_hh": w_hh,
        "w_nrm_pad": w_nrm_pad, "b_nrm_pad": b_nrm_pad,
        "w_spt_cpy": w_spt_cpy, "b_spt_cpy": b_spt_cpy,
        "keywords": keywords,
    }


# ----------------------------------------------------------------------------
# Pure-JAX reference of the same (bf16-matmul) pipeline, for validation.
# ----------------------------------------------------------------------------
def _reference_forward(inp_word, masks, params, nwrd, ntgt):
    bs, ls = inp_word.shape
    h = params["w_hh"].shape[-1]
    emb = params["word_table"][inp_word]
    x = emb.reshape(bs * ls, -1)
    gx = (jnp.dot(x.astype(jnp.bfloat16), params["w_ih"],
                  preferred_element_type=jnp.float32) + params["b_ih"])
    gx = gx.reshape(bs, ls, 2, 4, h)
    w_hh = params["w_hh"]

    def run_dir(d):
        order = range(ls) if d == 0 else range(ls - 1, -1, -1)
        hstate = jnp.zeros((bs, h), jnp.float32)
        cstate = jnp.zeros((bs, h), jnp.float32)
        outs = [None] * ls
        for t in order:
            gates = [gx[:, t, d, j]
                     + jnp.dot(hstate.astype(jnp.bfloat16),
                               w_hh[d, j].astype(jnp.bfloat16),
                               preferred_element_type=jnp.float32)
                     for j in range(4)]
            i_g = jax.nn.sigmoid(gates[0])
            f_g = jax.nn.sigmoid(gates[1])
            g_g = jnp.tanh(gates[2])
            o_g = jax.nn.sigmoid(gates[3])
            c_new = f_g * cstate + i_g * g_g
            h_new = o_g * jnp.tanh(c_new)
            mt = masks[:, t][:, None].astype(jnp.float32)
            hstate = mt * h_new + (1.0 - mt) * hstate
            cstate = mt * c_new + (1.0 - mt) * cstate
            outs[t] = hstate
        return jnp.stack(outs, axis=1)

    ctx = jnp.concatenate([run_dir(0), run_dir(1)], axis=-1).reshape(bs * ls, 2 * h)
    ctx_bf = ctx.astype(jnp.bfloat16)
    spt_pad = params["w_spt_cpy"].shape[1] - ctx.shape[1]
    sc = (jnp.dot(ctx_bf, params["w_spt_cpy"], preferred_element_type=jnp.float32)
          + params["b_spt_cpy"])
    spt_logit = sc[:, :ntgt]
    cpy_hx = sc[:, spt_pad:]
    pcpy = jnp.sum(cpy_hx * ctx, axis=-1, keepdims=True)
    nrm_logit = (jnp.dot(ctx_bf, params["w_nrm_pad"][:, :nwrd],
                         preferred_element_type=jnp.float32)
                 + params["b_nrm_pad"][:, :nwrd])
    pspt = jnp.log(jax.nn.softmax(spt_logit, axis=-1) + 1e-12)
    joint = jnp.concatenate([nrm_logit, pcpy], axis=-1)
    pnrm = jnp.log(jax.nn.softmax(joint, axis=-1) + 1e-12)
    return pspt, pnrm


# ----------------------------------------------------------------------------
if __name__ == "__main__":
    key = jax.random.PRNGKey(0)

    bs, ls = 2, 8
    nwrd = 64        # vocabulary size
    word_dim = 32    # cfg_g.word_dim == cfg.inp_dim
    ctx_fs = 16      # per-direction LSTM hidden size
    ntgt = 8         # number of target (obfuscation) words
    keywords = jnp.array([3, 7, 11, 19, 23], dtype=jnp.int32)

    k_par, k_w, k_c, k_p = jax.random.split(key, 4)
    params = make_params(k_par, nwrd, word_dim, ctx_fs, ntgt, keywords)

    inp_word = jax.random.randint(k_w, (bs, ls), 0, nwrd, dtype=jnp.int32)
    inp_char = jax.random.randint(k_c, (bs, ls, 4), 0, 16, dtype=jnp.int32)
    inp_pos = jax.random.randint(k_p, (bs, ls), 0, 8, dtype=jnp.int32)
    masks = jnp.array([[1, 1, 1, 1, 1, 1, 1, 1],
                       [1, 1, 1, 1, 1, 1, 0, 0]], dtype=jnp.float32)

    out = seq_copy_generator_forward(inp_word, inp_char, inp_pos, masks, params)
    out = jax.block_until_ready(out)

    N = bs * ls
    spt_pad = _round_up(ntgt, 128)
    _, v_pad = _vocab_tiling(nwrd)
    assert out["pspt"].shape == (N, spt_pad)
    assert out["pnrm"].shape == (N, v_pad)
    assert out["obf_mask"].shape == (bs, ls)
    assert bool(jnp.all(jnp.isfinite(out["pspt"])))
    assert bool(jnp.all(jnp.isfinite(out["pnrm"])))
    # valid columns of the joint softmax (nwrd words + copy logit) sum to ~1
    assert bool(jnp.allclose(jnp.exp(out["pnrm"][:, :nwrd + 1]).sum(-1), 1.0,
                             atol=1e-4))
    # valid columns of the spt softmax sum to ~1
    assert bool(jnp.allclose(jnp.exp(out["pspt"][:, :ntgt]).sum(-1), 1.0,
                             atol=1e-4))

    # cross-check against a pure-JAX reference of the same bf16-matmul pipeline
    ref_pspt, ref_pnrm = _reference_forward(inp_word, masks, params, nwrd, ntgt)
    assert bool(jnp.allclose(out["pspt"][:, :ntgt], ref_pspt, atol=2e-2))
    assert bool(jnp.allclose(out["pnrm"][:, :nwrd + 1], ref_pnrm, atol=2e-2))

    print("KERNEL_OK")
</pallas_src>

<mosaic_0001>
module attributes {stable_mosaic.version = 11 : i64} {
  func.func @_linear_kernel(%arg0: i32, %arg1: memref<8x32xf32, #tpu.memory_space<vmem>>, %arg2: memref<32x128xbf16, #tpu.memory_space<vmem>>, %arg3: memref<1x128xf32, #tpu.memory_space<vmem>>, %arg4: memref<8x128xf32, #tpu.memory_space<vmem>>) attributes {dimension_semantics = [#tpu.dimension_semantics<parallel>], iteration_bounds = array<i64: 2>, scalar_prefetch = 0 : i64, scratch_operands = 0 : i64, tpu.core_type = #tpu.core_type<tc>, window_params = [{transform_indices = @transform_0, window_bounds = array<i64: 8, 32>}, {pipeline_mode = #tpu.pipeline_mode<synchronous>, transform_indices = @transform_1, window_bounds = array<i64: 32, 128>}, {pipeline_mode = #tpu.pipeline_mode<synchronous>, transform_indices = @transform_2, window_bounds = array<i64: 1, 128>}, {transform_indices = @transform_3, window_bounds = array<i64: 8, 128>}]} {
    %c0 = arith.constant 0 : index
    %c0_0 = arith.constant 0 : index
    %0 = vector.load %arg1[%c0, %c0_0] : memref<8x32xf32, #tpu.memory_space<vmem>>, vector<8x32xf32>
    %1 = arith.truncf %0 : vector<8x32xf32> to vector<8x32xbf16>
    %c0_1 = arith.constant 0 : index
    %c0_2 = arith.constant 0 : index
    %2 = vector.load %arg2[%c0_1, %c0_2] : memref<32x128xbf16, #tpu.memory_space<vmem>>, vector<32x128xbf16>
    %cst = arith.constant dense<0.000000e+00> : vector<8x128xf32>
    %3 = tpu.matmul %1, %2, %cst {dimension_numbers = #tpu.dot_dimension_numbers<[1], [0], [0], [1], [0, 0, 1, 1], [], []>} : vector<8x32xbf16>, vector<32x128xbf16>, vector<8x128xf32> -> vector<8x128xf32>
    %c0_3 = arith.constant 0 : index
    %c0_4 = arith.constant 0 : index
    %4 = vector.load %arg3[%c0_3, %c0_4] : memref<1x128xf32, #tpu.memory_space<vmem>>, vector<1x128xf32>
    %5 = vector.broadcast %4 : vector<1x128xf32> to vector<8x128xf32>
    %6 = arith.addf %3, %5 : vector<8x128xf32>
    %c0_5 = arith.constant 0 : index
    %c0_6 = arith.constant 0 : index
    %7 = vector.load %arg4[%c0_5, %c0_6] : memref<8x128xf32, #tpu.memory_space<vmem>>, vector<8x128xf32>
    tpu.vector_store %arg4[%c0_5, %c0_6], %6 {strides = array<i32>} : memref<8x128xf32, #tpu.memory_space<vmem>>, vector<8x128xf32>,
    return
  }
  func.func @transform_0(%arg0: i32) -> (i32, i32) {
    %c0_i32 = arith.constant 0 : i32
    %c0_i32_0 = arith.constant 0 : i32
    return %arg0, %c0_i32 : i32, i32
  }
  func.func @transform_1(%arg0: i32) -> (i32, i32) {
    %c0_i32 = arith.constant 0 : i32
    %c0_i32_0 = arith.constant 0 : i32
    %c0_i32_1 = arith.constant 0 : i32
    return %c0_i32, %c0_i32_0 : i32, i32
  }
  func.func @transform_2(%arg0: i32) -> (i32, i32) {
    %c0_i32 = arith.constant 0 : i32
    %c0_i32_0 = arith.constant 0 : i32
    %c0_i32_1 = arith.constant 0 : i32
    return %c0_i32, %c0_i32_0 : i32, i32
  }
  func.func @transform_3(%arg0: i32) -> (i32, i32) {
    %c0_i32 = arith.constant 0 : i32
    %c0_i32_0 = arith.constant 0 : i32
    return %arg0, %c0_i32 : i32, i32
  }
}

module attributes {stable_mosaic.version = 11 : i64} {
  func.func @_bidir_lstm_kernel(%arg0: i32, %arg1: memref<1x8x4x2x16xf32, #tpu.memory_space<vmem>>, %arg2: memref<8x2x1xf32, #tpu.memory_space<vmem>>, %arg3: memref<1x4x16x16xf32, #tpu.memory_space<vmem>>, %arg4: memref<1x8x2x16xf32, #tpu.memory_space<vmem>>, %arg5: memref<2x16xf32, #tpu.memory_space<vmem>>, %arg6: memref<2x16xf32, #tpu.memory_space<vmem>>) attributes {dimension_semantics = [#tpu.dimension_semantics<parallel>], iteration_bounds = array<i64: 2>, scalar_prefetch = 0 : i64, scratch_operands = 2 : i64, tpu.core_type = #tpu.core_type<tc>, window_params = [{transform_indices = @transform_0, window_bounds = array<i64: 1, 8, 4, 2, 16>}, {pipeline_mode = #tpu.pipeline_mode<synchronous>, transform_indices = @transform_1, window_bounds = array<i64: 8, 2, 1>}, {transform_indices = @transform_2, window_bounds = array<i64: 1, 4, 16, 16>}, {transform_indices = @transform_3, window_bounds = array<i64: 1, 8, 2, 16>}]} {
    %cst = arith.constant 0.000000e+00 : f32
    %0 = vector.broadcast %cst : f32 to vector<2x16xf32>
    %c0 = arith.constant 0 : index
    %c0_0 = arith.constant 0 : index
    %1 = vector.load %arg5[%c0, %c0_0] : memref<2x16xf32, #tpu.memory_space<vmem>>, vector<2x16xf32>
    tpu.vector_store %arg5[%c0, %c0_0], %0 {strides = array<i32>} : memref<2x16xf32, #tpu.memory_space<vmem>>, vector<2x16xf32>,
    %cst_1 = arith.constant 0.000000e+00 : f32
    %2 = vector.broadcast %cst_1 : f32 to vector<2x16xf32>
    %c0_2 = arith.constant 0 : index
    %c0_3 = arith.constant 0 : index
    %3 = vector.load %arg6[%c0_2, %c0_3] : memref<2x16xf32, #tpu.memory_space<vmem>>, vector<2x16xf32>
    tpu.vector_store %arg6[%c0_2, %c0_3], %2 {strides = array<i32>} : memref<2x16xf32, #tpu.memory_space<vmem>>, vector<2x16xf32>,
    %c0_4 = arith.constant 0 : index
    %c0_5 = arith.constant 0 : index
    %c0_6 = arith.constant 0 : index
    %c0_7 = arith.constant 0 : index
    %4 = vector.load %arg3[%c0_4, %c0_5, %c0_6, %c0_7] : memref<1x4x16x16xf32, #tpu.memory_space<vmem>>, vector<1x4x16x16xf32>
    %5 = vector.shape_cast %4 : vector<1x4x16x16xf32> to vector<4x16x16xf32>
    %6 = arith.truncf %5 : vector<4x16x16xf32> to vector<4x16x16xbf16>
    %c0_i32 = arith.constant 0 : i32
    %c8_i32 = arith.constant 8 : i32
    %7 = arith.addi %c0_i32, %c8_i32 : i32
    %c1_i32 = arith.constant 1 : i32
    scf.for %arg7 = %c0_i32 to %7 step %c1_i32  : i32 {
      %c0_i32_9 = arith.constant 0 : i32
      %8 = arith.cmpi eq, %arg0, %c0_i32_9 : i32
      %c7_i32 = arith.constant 7 : i32
      %9 = arith.subi %c7_i32, %arg7 : i32
      %10 = arith.select %8, %arg7, %9 : i32
      %c0_10 = arith.constant 0 : index
      %c0_11 = arith.constant 0 : index
      %11 = vector.load %arg5[%c0_10, %c0_11] : memref<2x16xf32, #tpu.memory_space<vmem>>, vector<2x16xf32>
      %c0_12 = arith.constant 0 : index
      %c0_13 = arith.constant 0 : index
      %12 = vector.load %arg6[%c0_12, %c0_13] : memref<2x16xf32, #tpu.memory_space<vmem>>, vector<2x16xf32>
      %13 = arith.truncf %11 : vector<2x16xf32> to vector<2x16xbf16>
      %c0_14 = arith.constant 0 : index
      %14 = arith.index_cast %10 : i32 to index
      %c0_15 = arith.constant 0 : index
      %c0_16 = arith.constant 0 : index
      %c0_17 = arith.constant 0 : index
      %15 = vector.load %arg1[%c0_14, %14, %c0_15, %c0_16, %c0_17] : memref<1x8x4x2x16xf32, #tpu.memory_space<vmem>>, vector<1x1x4x2x16xf32>
      %16 = vector.shape_cast %15 : vector<1x1x4x2x16xf32> to vector<4x2x16xf32>
      %17 = vector.extract_strided_slice %16 {offsets = [0, 0, 0], sizes = [1, 2, 16], strides = [1, 1, 1]} : vector<4x2x16xf32> to vector<1x2x16xf32>
      %18 = vector.shape_cast %17 : vector<1x2x16xf32> to vector<2x16xf32>
      %19 = vector.extract_strided_slice %6 {offsets = [0, 0, 0], sizes = [1, 16, 16], strides = [1, 1, 1]} : vector<4x16x16xbf16> to vector<1x16x16xbf16>
      %20 = vector.shape_cast %19 : vector<1x16x16xbf16> to vector<16x16xbf16>
      %cst_18 = arith.constant dense<0.000000e+00> : vector<2x16xf32>
      %21 = tpu.matmul %13, %20, %cst_18 {dimension_numbers = #tpu.dot_dimension_numbers<[1], [0], [0], [1], [0, 0, 1, 1], [], []>} : vector<2x16xbf16>, vector<16x16xbf16>, vector<2x16xf32> -> vector<2x16xf32>
      %22 = arith.addf %18, %21 : vector<2x16xf32>
      %23 = vector.extract_strided_slice %16 {offsets = [1, 0, 0], sizes = [1, 2, 16], strides = [1, 1, 1]} : vector<4x2x16xf32> to vector<1x2x16xf32>
      %24 = vector.shape_cast %23 : vector<1x2x16xf32> to vector<2x16xf32>
      %25 = vector.extract_strided_slice %6 {offsets = [1, 0, 0], sizes = [1, 16, 16], strides = [1, 1, 1]} : vector<4x16x16xbf16> to vector<1x16x16xbf16>
      %26 = vector.shape_cast %25 : vector<1x16x16xbf16> to vector<16x16xbf16>
      %cst_19 = arith.constant dense<0.000000e+00> : vector<2x16xf32>
      %27 = tpu.matmul %13, %26, %cst_19 {dimension_numbers = #tpu.dot_dimension_numbers<[1], [0], [0], [1], [0, 0, 1, 1], [], []>} : vector<2x16xbf16>, vector<16x16xbf16>, vector<2x16xf32> -> vector<2x16xf32>
      %28 = arith.addf %24, %27 : vector<2x16xf32>
      %29 = vector.extract_strided_slice %16 {offsets = [2, 0, 0], sizes = [1, 2, 16], strides = [1, 1, 1]} : vector<4x2x16xf32> to vector<1x2x16xf32>
      %30 = vector.shape_cast %29 : vector<1x2x16xf32> to vector<2x16xf32>
      %31 = vector.extract_strided_slice %6 {offsets = [2, 0, 0], sizes = [1, 16, 16], strides = [1, 1, 1]} : vector<4x16x16xbf16> to vector<1x16x16xbf16>
      %32 = vector.shape_cast %31 : vector<1x16x16xbf16> to vector<16x16xbf16>
      %cst_20 = arith.constant dense<0.000000e+00> : vector<2x16xf32>
      %33 = tpu.matmul %13, %32, %cst_20 {dimension_numbers = #tpu.dot_dimension_numbers<[1], [0], [0], [1], [0, 0, 1, 1], [], []>} : vector<2x16xbf16>, vector<16x16xbf16>, vector<2x16xf32> -> vector<2x16xf32>
      %34 = arith.addf %30, %33 : vector<2x16xf32>
      %35 = vector.extract_strided_slice %16 {offsets = [3, 0, 0], sizes = [1, 2, 16], strides = [1, 1, 1]} : vector<4x2x16xf32> to vector<1x2x16xf32>
      %36 = vector.shape_cast %35 : vector<1x2x16xf32> to vector<2x16xf32>
      %37 = vector.extract_strided_slice %6 {offsets = [3, 0, 0], sizes = [1, 16, 16], strides = [1, 1, 1]} : vector<4x16x16xbf16> to vector<1x16x16xbf16>
      %38 = vector.shape_cast %37 : vector<1x16x16xbf16> to vector<16x16xbf16>
      %cst_21 = arith.constant dense<0.000000e+00> : vector<2x16xf32>
      %39 = tpu.matmul %13, %38, %cst_21 {dimension_numbers = #tpu.dot_dimension_numbers<[1], [0], [0], [1], [0, 0, 1, 1], [], []>} : vector<2x16xbf16>, vector<16x16xbf16>, vector<2x16xf32> -> vector<2x16xf32>
      %40 = arith.addf %36, %39 : vector<2x16xf32>
      %41 = arith.negf %22 : vector<2x16xf32>
      %42 = math.exp %41 : vector<2x16xf32>
      %cst_22 = arith.constant 1.000000e+00 : f32
      %43 = vector.broadcast %cst_22 : f32 to vector<2x16xf32>
      %44 = arith.addf %43, %42 : vector<2x16xf32>
      %45 = arith.divf %43, %44 : vector<2x16xf32>
      %46 = arith.negf %28 : vector<2x16xf32>
      %47 = math.exp %46 : vector<2x16xf32>
      %cst_23 = arith.constant 1.000000e+00 : f32
      %48 = vector.broadcast %cst_23 : f32 to vector<2x16xf32>
      %49 = arith.addf %48, %47 : vector<2x16xf32>
      %50 = arith.divf %48, %49 : vector<2x16xf32>
      %51 = math.tanh %34 : vector<2x16xf32>
      %52 = arith.negf %40 : vector<2x16xf32>
      %53 = math.exp %52 : vector<2x16xf32>
      %cst_24 = arith.constant 1.000000e+00 : f32
      %54 = vector.broadcast %cst_24 : f32 to vector<2x16xf32>
      %55 = arith.addf %54, %53 : vector<2x16xf32>
      %56 = arith.divf %54, %55 : vector<2x16xf32>
      %57 = arith.mulf %50, %12 : vector<2x16xf32>
      %58 = arith.mulf %45, %51 : vector<2x16xf32>
      %59 = arith.addf %57, %58 : vector<2x16xf32>
      %60 = math.tanh %59 : vector<2x16xf32>
      %61 = arith.mulf %56, %60 : vector<2x16xf32>
      %62 = arith.index_cast %10 : i32 to index
      %c0_25 = arith.constant 0 : index
      %c0_26 = arith.constant 0 : index
      %63 = vector.load %arg2[%62, %c0_25, %c0_26] : memref<8x2x1xf32, #tpu.memory_space<vmem>>, vector<1x2x1xf32>
      %64 = vector.shape_cast %63 : vector<1x2x1xf32> to vector<2x1xf32>
      %65 = vector.broadcast %64 : vector<2x1xf32> to vector<2x16xf32>
      %66 = arith.mulf %65, %61 : vector<2x16xf32>
      %cst_27 = arith.constant 1.000000e+00 : f32
      %67 = vector.broadcast %cst_27 : f32 to vector<2x1xf32>
      %68 = arith.subf %67, %64 : vector<2x1xf32>
      %69 = vector.broadcast %68 : vector<2x1xf32> to vector<2x16xf32>
      %70 = arith.mulf %69, %11 : vector<2x16xf32>
      %71 = arith.addf %66, %70 : vector<2x16xf32>
      %72 = vector.broadcast %64 : vector<2x1xf32> to vector<2x16xf32>
      %73 = arith.mulf %72, %59 : vector<2x16xf32>
      %cst_28 = arith.constant 1.000000e+00 : f32
      %74 = vector.broadcast %cst_28 : f32 to vector<2x1xf32>
      %75 = arith.subf %74, %64 : vector<2x1xf32>
      %76 = vector.broadcast %75 : vector<2x1xf32> to vector<2x16xf32>
      %77 = arith.mulf %76, %12 : vector<2x16xf32>
      %78 = arith.addf %73, %77 : vector<2x16xf32>
      %c0_29 = arith.constant 0 : index
      %c0_30 = arith.constant 0 : index
      %79 = vector.load %arg5[%c0_29, %c0_30] : memref<2x16xf32, #tpu.memory_space<vmem>>, vector<2x16xf32>
      tpu.vector_store %arg5[%c0_29, %c0_30], %71 {strides = array<i32>} : memref<2x16xf32, #tpu.memory_space<vmem>>, vector<2x16xf32>,
      %c0_31 = arith.constant 0 : index
      %c0_32 = arith.constant 0 : index
      %80 = vector.load %arg6[%c0_31, %c0_32] : memref<2x16xf32, #tpu.memory_space<vmem>>, vector<2x16xf32>
      tpu.vector_store %arg6[%c0_31, %c0_32], %78 {strides = array<i32>} : memref<2x16xf32, #tpu.memory_space<vmem>>, vector<2x16xf32>,
      %c0_33 = arith.constant 0 : index
      %81 = arith.index_cast %10 : i32 to index
      %c0_34 = arith.constant 0 : index
      %c0_35 = arith.constant 0 : index
      %82 = vector.load %arg4[%c0_33, %81, %c0_34, %c0_35] : memref<1x8x2x16xf32, #tpu.memory_space<vmem>>, vector<1x1x2x16xf32>
      %83 = vector.shape_cast %82 : vector<1x1x2x16xf32> to vector<2x16xf32>
      %84 = vector.shape_cast %71 : vector<2x16xf32> to vector<1x1x2x16xf32>
      tpu.vector_store %arg4[%c0_33, %81, %c0_34, %c0_35], %84 {strides = array<i32>} : memref<1x8x2x16xf32, #tpu.memory_space<vmem>>, vector<1x1x2x16xf32>,
    }
    %c8_i32_8 = arith.constant 8 : i32
    return
  }
  func.func @transform_0(%arg0: i32) -> (i32, i32, i32, i32, i32) {
    %c0_i32 = arith.constant 0 : i32
    %c0_i32_0 = arith.constant 0 : i32
    %c0_i32_1 = arith.constant 0 : i32
    %c0_i32_2 = arith.constant 0 : i32
    %c0_i32_3 = arith.constant 0 : i32
    return %arg0, %c0_i32, %c0_i32_0, %c0_i32_1, %c0_i32_2 : i32, i32, i32, i32, i32
  }
  func.func @transform_1(%arg0: i32) -> (i32, i32, i32) {
    %c0_i32 = arith.constant 0 : i32
    %c0_i32_0 = arith.constant 0 : i32
    %c0_i32_1 = arith.constant 0 : i32
    %c0_i32_2 = arith.constant 0 : i32
    return %c0_i32, %c0_i32_0, %c0_i32_1 : i32, i32, i32
  }
  func.func @transform_2(%arg0: i32) -> (i32, i32, i32, i32) {
    %c0_i32 = arith.constant 0 : i32
    %c0_i32_0 = arith.constant 0 : i32
    %c0_i32_1 = arith.constant 0 : i32
    %c0_i32_2 = arith.constant 0 : i32
    return %arg0, %c0_i32, %c0_i32_0, %c0_i32_1 : i32, i32, i32, i32
  }
  func.func @transform_3(%arg0: i32) -> (i32, i32, i32, i32) {
    %c0_i32 = arith.constant 0 : i32
    %c0_i32_0 = arith.constant 0 : i32
    %c0_i32_1 = arith.constant 0 : i32
    %c0_i32_2 = arith.constant 0 : i32
    return %arg0, %c0_i32, %c0_i32_0, %c0_i32_1 : i32, i32, i32, i32
  }
}

module attributes {stable_mosaic.version = 11 : i64} {
  func.func @_lognorm_kernel(%arg0: i32, %arg1: i32, %arg2: memref<8x128xf32, #tpu.memory_space<vmem>>, %arg3: memref<8x1xf32, #tpu.memory_space<vmem>>, %arg4: memref<8x128xf32, #tpu.memory_space<vmem>>) attributes {dimension_semantics = [#tpu.dimension_semantics<parallel>, #tpu.dimension_semantics<arbitrary>], iteration_bounds = array<i64: 2, 1>, scalar_prefetch = 0 : i64, scratch_operands = 0 : i64, tpu.core_type = #tpu.core_type<tc>, window_params = [{transform_indices = @transform_0, window_bounds = array<i64: 8, 128>}, {transform_indices = @transform_1, window_bounds = array<i64: 8, 1>}, {transform_indices = @transform_2, window_bounds = array<i64: 8, 128>}]} {
    %c0 = arith.constant 0 : index
    %c0_0 = arith.constant 0 : index
    %0 = vector.load %arg2[%c0, %c0_0] : memref<8x128xf32, #tpu.memory_space<vmem>>, vector<8x128xf32>
    %c0_1 = arith.constant 0 : index
    %c0_2 = arith.constant 0 : index
    %1 = vector.load %arg3[%c0_1, %c0_2] : memref<8x1xf32, #tpu.memory_space<vmem>>, vector<8x1xf32>
    %2 = vector.broadcast %1 : vector<8x1xf32> to vector<8x128xf32>
    %3 = arith.subf %0, %2 : vector<8x128xf32>
    %cst = arith.constant -27.6310215 : f32
    %4 = vector.broadcast %cst : f32 to vector<8x128xf32>
    %5 = arith.maximumf %3, %4 : vector<8x128xf32>
    %c0_3 = arith.constant 0 : index
    %c0_4 = arith.constant 0 : index
    %6 = vector.load %arg4[%c0_3, %c0_4] : memref<8x128xf32, #tpu.memory_space<vmem>>, vector<8x128xf32>
    tpu.vector_store %arg4[%c0_3, %c0_4], %5 {strides = array<i32>} : memref<8x128xf32, #tpu.memory_space<vmem>>, vector<8x128xf32>,
    return
  }
  func.func @transform_0(%arg0: i32, %arg1: i32) -> (i32, i32) {
    %c0_i32 = arith.constant 0 : i32
    return %arg0, %arg1 : i32, i32
  }
  func.func @transform_1(%arg0: i32, %arg1: i32) -> (i32, i32) {
    %c0_i32 = arith.constant 0 : i32
    %c0_i32_0 = arith.constant 0 : i32
    return %arg0, %c0_i32 : i32, i32
  }
  func.func @transform_2(%arg0: i32, %arg1: i32) -> (i32, i32) {
    %c0_i32 = arith.constant 0 : i32
    return %arg0, %arg1 : i32, i32
  }
}

module attributes {stable_mosaic.version = 11 : i64} {
  func.func @_head_pass_kernel(%arg0: i32, %arg1: i32, %arg2: memref<8x32xf32, #tpu.memory_space<vmem>>, %arg3: memref<32x128xbf16, #tpu.memory_space<vmem>>, %arg4: memref<1x128xf32, #tpu.memory_space<vmem>>, %arg5: memref<32x160xbf16, #tpu.memory_space<vmem>>, %arg6: memref<1x160xf32, #tpu.memory_space<vmem>>, %arg7: memref<8x128xf32, #tpu.memory_space<vmem>>, %arg8: memref<8x128xf32, #tpu.memory_space<vmem>>, %arg9: memref<8x1xf32, #tpu.memory_space<vmem>>, %arg10: memref<8x1xf32, #tpu.memory_space<vmem>>, %arg11: memref<8x1xf32, #tpu.memory_space<vmem>>, %arg12: memref<8x1xf32, #tpu.memory_space<vmem>>) attributes {dimension_semantics = [#tpu.dimension_semantics<parallel>, #tpu.dimension_semantics<arbitrary>], iteration_bounds = array<i64: 2, 1>, scalar_prefetch = 0 : i64, scratch_operands = 3 : i64, tpu.core_type = #tpu.core_type<tc>, window_params = [{transform_indices = @transform_0, window_bounds = array<i64: 8, 32>}, {transform_indices = @transform_1, window_bounds = array<i64: 32, 128>}, {transform_indices = @transform_2, window_bounds = array<i64: 1, 128>}, {pipeline_mode = #tpu.pipeline_mode<synchronous>, transform_indices = @transform_3, window_bounds = array<i64: 32, 160>}, {pipeline_mode = #tpu.pipeline_mode<synchronous>, transform_indices = @transform_4, window_bounds = array<i64: 1, 160>}, {transform_indices = @transform_5, window_bounds = array<i64: 8, 128>}, {transform_indices = @transform_6, window_bounds = array<i64: 8, 128>}, {transform_indices = @transform_7, window_bounds = array<i64: 8, 1>}]} {
    %c0 = arith.constant 0 : index
    %c0_0 = arith.constant 0 : index
    %0 = vector.load %arg2[%c0, %c0_0] : memref<8x32xf32, #tpu.memory_space<vmem>>, vector<8x32xf32>
    %1 = arith.truncf %0 : vector<8x32xf32> to vector<8x32xbf16>
    %c0_1 = arith.constant 0 : index
    %c0_2 = arith.constant 0 : index
    %2 = vector.load %arg3[%c0_1, %c0_2] : memref<32x128xbf16, #tpu.memory_space<vmem>>, vector<32x128xbf16>
    %cst = arith.constant dense<0.000000e+00> : vector<8x128xf32>
    %3 = tpu.matmul %1, %2, %cst {dimension_numbers = #tpu.dot_dimension_numbers<[1], [0], [0], [1], [0, 0, 1, 1], [], []>} : vector<8x32xbf16>, vector<32x128xbf16>, vector<8x128xf32> -> vector<8x128xf32>
    %c0_3 = arith.constant 0 : index
    %c0_4 = arith.constant 0 : index
    %4 = vector.load %arg4[%c0_3, %c0_4] : memref<1x128xf32, #tpu.memory_space<vmem>>, vector<1x128xf32>
    %5 = vector.broadcast %4 : vector<1x128xf32> to vector<8x128xf32>
    %6 = arith.addf %3, %5 : vector<8x128xf32>
    %c0_i32 = arith.constant 0 : i32
    %7 = arith.cmpi eq, %arg1, %c0_i32 : i32
    %8 = arith.extui %7 : i1 to i32
    %c0_i32_5 = arith.constant 0 : i32
    %9 = arith.cmpi ne, %8, %c0_i32_5 : i32
    scf.if %9 {
      %c0_12 = arith.constant 0 : index
      %c0_13 = arith.constant 0 : index
      %19 = vector.load %arg5[%c0_12, %c0_13] : memref<32x160xbf16, #tpu.memory_space<vmem>>, vector<32x160xbf16>
      %cst_14 = arith.constant dense<0.000000e+00> : vector<8x160xf32>
      %20 = tpu.matmul %1, %19, %cst_14 {dimension_numbers = #tpu.dot_dimension_numbers<[1], [0], [0], [1], [0, 0, 1, 1], [], []>} : vector<8x32xbf16>, vector<32x160xbf16>, vector<8x160xf32> -> vector<8x160xf32>
      %c0_15 = arith.constant 0 : index
      %c0_16 = arith.constant 0 : index
      %21 = vector.load %arg6[%c0_15, %c0_16] : memref<1x160xf32, #tpu.memory_space<vmem>>, vector<1x160xf32>
      %22 = vector.broadcast %21 : vector<1x160xf32> to vector<8x160xf32>
      %23 = arith.addf %20, %22 : vector<8x160xf32>
      %24 = vector.extract_strided_slice %23 {offsets = [0, 0], sizes = [8, 128], strides = [1, 1]} : vector<8x160xf32> to vector<8x128xf32>
      %25 = vector.extract_strided_slice %23 {offsets = [0, 128], sizes = [8, 32], strides = [1, 1]} : vector<8x160xf32> to vector<8x32xf32>
      %26 = arith.mulf %25, %0 : vector<8x32xf32>
      %cst_17 = arith.constant dense<0.000000e+00> : vector<8xf32>
      %27 = vector.multi_reduction <add>, %26, %cst_17 [1] : vector<8x32xf32> to vector<8xf32>
      %28 = vector.shape_cast %27 : vector<8xf32> to vector<8x1xf32>
      %c0_18 = arith.constant 0 : index
      %c0_19 = arith.constant 0 : index
      %29 = vector.load %arg12[%c0_18, %c0_19] : memref<8x1xf32, #tpu.memory_space<vmem>>, vector<8x1xf32>
      tpu.vector_store %arg12[%c0_18, %c0_19], %28 {strides = array<i32>} : memref<8x1xf32, #tpu.memory_space<vmem>>, vector<8x1xf32>,
      %cst_20 = arith.constant dense<0xFF800000> : vector<8xf32>
      %30 = vector.multi_reduction <maximumf>, %24, %cst_20 [1] : vector<8x128xf32> to vector<8xf32>
      %31 = vector.shape_cast %30 : vector<8xf32> to vector<8x1xf32>
      %32 = vector.broadcast %31 : vector<8x1xf32> to vector<8x128xf32>
      %33 = arith.subf %24, %32 : vector<8x128xf32>
      %34 = math.exp %33 : vector<8x128xf32>
      %cst_21 = arith.constant dense<0.000000e+00> : vector<8xf32>
      %35 = vector.multi_reduction <add>, %34, %cst_21 [1] : vector<8x128xf32> to vector<8xf32>
      %36 = vector.shape_cast %35 : vector<8xf32> to vector<8x1xf32>
      %37 = vector.broadcast %31 : vector<8x1xf32> to vector<8x128xf32>
      %38 = arith.subf %24, %37 : vector<8x128xf32>
      %39 = math.log %36 : vector<8x1xf32>
      %40 = vector.broadcast %39 : vector<8x1xf32> to vector<8x128xf32>
      %41 = arith.subf %38, %40 : vector<8x128xf32>
      %cst_22 = arith.constant -27.6310215 : f32
      %42 = vector.broadcast %cst_22 : f32 to vector<8x128xf32>
      %43 = arith.maximumf %41, %42 : vector<8x128xf32>
      %c0_23 = arith.constant 0 : index
      %c0_24 = arith.constant 0 : index
      %44 = vector.load %arg7[%c0_23, %c0_24] : memref<8x128xf32, #tpu.memory_space<vmem>>, vector<8x128xf32>
      tpu.vector_store %arg7[%c0_23, %c0_24], %43 {strides = array<i32>} : memref<8x128xf32, #tpu.memory_space<vmem>>, vector<8x128xf32>,
      %cst_25 = arith.constant dense<0xFF800000> : vector<8xf32>
      %45 = vector.multi_reduction <maximumf>, %6, %cst_25 [1] : vector<8x128xf32> to vector<8xf32>
      %46 = vector.shape_cast %45 : vector<8xf32> to vector<8x1xf32>
      %47 = arith.maximumf %46, %28 : vector<8x1xf32>
      %48 = vector.broadcast %47 : vector<8x1xf32> to vector<8x128xf32>
      %49 = arith.subf %6, %48 : vector<8x128xf32>
      %50 = math.exp %49 : vector<8x128xf32>
      %cst_26 = arith.constant dense<0.000000e+00> : vector<8xf32>
      %51 = vector.multi_reduction <add>, %50, %cst_26 [1] : vector<8x128xf32> to vector<8xf32>
      %52 = vector.shape_cast %51 : vector<8xf32> to vector<8x1xf32>
      %53 = arith.subf %28, %47 : vector<8x1xf32>
      %54 = math.exp %53 : vector<8x1xf32>
      %55 = arith.addf %52, %54 : vector<8x1xf32>
      %c0_27 = arith.constant 0 : index
      %c0_28 = arith.constant 0 : index
      %56 = vector.load %arg11[%c0_27, %c0_28] : memref<8x1xf32, #tpu.memory_space<vmem>>, vector<8x1xf32>
      tpu.vector_store %arg11[%c0_27, %c0_28], %55 {strides = array<i32>} : memref<8x1xf32, #tpu.memory_space<vmem>>, vector<8x1xf32>,
      %c0_29 = arith.constant 0 : index
      %c0_30 = arith.constant 0 : index
      %57 = vector.load %arg10[%c0_29, %c0_30] : memref<8x1xf32, #tpu.memory_space<vmem>>, vector<8x1xf32>
      tpu.vector_store %arg10[%c0_29, %c0_30], %47 {strides = array<i32>} : memref<8x1xf32, #tpu.memory_space<vmem>>, vector<8x1xf32>,
    } else {
    }
    %c0_i32_6 = arith.constant 0 : i32
    %10 = arith.cmpi sgt, %arg1, %c0_i32_6 : i32
    %11 = arith.extui %10 : i1 to i32
    %c0_i32_7 = arith.constant 0 : i32
    %12 = arith.cmpi ne, %11, %c0_i32_7 : i32
    scf.if %12 {
      %c0_12 = arith.constant 0 : index
      %c0_13 = arith.constant 0 : index
      %19 = vector.load %arg10[%c0_12, %c0_13] : memref<8x1xf32, #tpu.memory_space<vmem>>, vector<8x1xf32>
      %cst_14 = arith.constant dense<0xFF800000> : vector<8xf32>
      %20 = vector.multi_reduction <maximumf>, %6, %cst_14 [1] : vector<8x128xf32> to vector<8xf32>
      %21 = vector.shape_cast %20 : vector<8xf32> to vector<8x1xf32>
      %22 = arith.maximumf %19, %21 : vector<8x1xf32>
      %c0_15 = arith.constant 0 : index
      %c0_16 = arith.constant 0 : index
      %23 = vector.load %arg11[%c0_15, %c0_16] : memref<8x1xf32, #tpu.memory_space<vmem>>, vector<8x1xf32>
      %24 = arith.subf %19, %22 : vector<8x1xf32>
      %25 = math.exp %24 : vector<8x1xf32>
      %26 = arith.mulf %23, %25 : vector<8x1xf32>
      %27 = vector.broadcast %22 : vector<8x1xf32> to vector<8x128xf32>
      %28 = arith.subf %6, %27 : vector<8x128xf32>
      %29 = math.exp %28 : vector<8x128xf32>
      %cst_17 = arith.constant dense<0.000000e+00> : vector<8xf32>
      %30 = vector.multi_reduction <add>, %29, %cst_17 [1] : vector<8x128xf32> to vector<8xf32>
      %31 = vector.shape_cast %30 : vector<8xf32> to vector<8x1xf32>
      %32 = arith.addf %26, %31 : vector<8x1xf32>
      %c0_18 = arith.constant 0 : index
      %c0_19 = arith.constant 0 : index
      %33 = vector.load %arg11[%c0_18, %c0_19] : memref<8x1xf32, #tpu.memory_space<vmem>>, vector<8x1xf32>
      tpu.vector_store %arg11[%c0_18, %c0_19], %32 {strides = array<i32>} : memref<8x1xf32, #tpu.memory_space<vmem>>, vector<8x1xf32>,
      %c0_20 = arith.constant 0 : index
      %c0_21 = arith.constant 0 : index
      %34 = vector.load %arg10[%c0_20, %c0_21] : memref<8x1xf32, #tpu.memory_space<vmem>>, vector<8x1xf32>
      tpu.vector_store %arg10[%c0_20, %c0_21], %22 {strides = array<i32>} : memref<8x1xf32, #tpu.memory_space<vmem>>, vector<8x1xf32>,
    } else {
    }
    %c0_i32_8 = arith.constant 0 : i32
    %13 = arith.cmpi slt, %arg1, %c0_i32_8 : i32
    %14 = arith.extui %13 : i1 to i32
    %c0_i32_9 = arith.constant 0 : i32
    %15 = arith.cmpi ne, %14, %c0_i32_9 : i32
    scf.if %15 {
      %c0_12 = arith.constant 0 : index
      %c0_13 = arith.constant 0 : index
      %19 = vector.load %arg8[%c0_12, %c0_13] : memref<8x128xf32, #tpu.memory_space<vmem>>, vector<8x128xf32>
      tpu.vector_store %arg8[%c0_12, %c0_13], %6 {strides = array<i32>} : memref<8x128xf32, #tpu.memory_space<vmem>>, vector<8x128xf32>,
    } else {
    }
    %c0_i32_10 = arith.constant 0 : i32
    %16 = arith.cmpi eq, %arg1, %c0_i32_10 : i32
    %17 = arith.extui %16 : i1 to i32
    %c0_i32_11 = arith.constant 0 : i32
    %18 = arith.cmpi ne, %17, %c0_i32_11 : i32
    scf.if %18 {
      %19 = tpu.iota {dimensions = array<i32: 1>} : vector<8x128xi32>
      %c64_i32 = arith.constant 64 : i32
      %20 = vector.broadcast %c64_i32 : i32 to vector<8x128xi32>
      %21 = arith.cmpi eq, %19, %20 : vector<8x128xi32>
      %c0_12 = arith.constant 0 : index
      %c0_13 = arith.constant 0 : index
      %22 = vector.load %arg12[%c0_12, %c0_13] : memref<8x1xf32, #tpu.memory_space<vmem>>, vector<8x1xf32>
      %23 = vector.shape_cast %22 : vector<8x1xf32> to vector<8x1xf32>
      %24 = vector.broadcast %23 : vector<8x1xf32> to vector<8x128xf32>
      %25 = arith.select %21, %24, %6 : vector<8x128xi1>, vector<8x128xf32>
      %c0_14 = arith.constant 0 : index
      %c0_15 = arith.constant 0 : index
      %26 = vector.load %arg8[%c0_14, %c0_15] : memref<8x128xf32, #tpu.memory_space<vmem>>, vector<8x128xf32>
      tpu.vector_store %arg8[%c0_14, %c0_15], %25 {strides = array<i32>} : memref<8x128xf32, #tpu.memory_space<vmem>>, vector<8x128xf32>,
      %c0_16 = arith.constant 0 : index
      %c0_17 = arith.constant 0 : index
      %27 = vector.load %arg10[%c0_16, %c0_17] : memref<8x1xf32, #tpu.memory_space<vmem>>, vector<8x1xf32>
      %c0_18 = arith.constant 0 : index
      %c0_19 = arith.constant 0 : index
      %28 = vector.load %arg11[%c0_18, %c0_19] : memref<8x1xf32, #tpu.memory_space<vmem>>, vector<8x1xf32>
      %29 = math.log %28 : vector<8x1xf32>
      %30 = arith.addf %27, %29 : vector<8x1xf32>
      %c0_20 = arith.constant 0 : index
      %c0_21 = arith.constant 0 : index
      %31 = vector.load %arg9[%c0_20, %c0_21] : memref<8x1xf32, #tpu.memory_space<vmem>>, vector<8x1xf32>
      tpu.vector_store %arg9[%c0_20, %c0_21], %30 {strides = array<i32>} : memref<8x1xf32, #tpu.memory_space<vmem>>, vector<8x1xf32>,
    } else {
    }
    return
  }
  func.func @transform_0(%arg0: i32, %arg1: i32) -> (i32, i32) {
    %c0_i32 = arith.constant 0 : i32
    %c0_i32_0 = arith.constant 0 : i32
    return %arg0, %c0_i32 : i32, i32
  }
  func.func @transform_1(%arg0: i32, %arg1: i32) -> (i32, i32) {
    %c0_i32 = arith.constant 0 : i32
    %c0_i32_0 = arith.constant 0 : i32
    return %c0_i32, %arg1 : i32, i32
  }
  func.func @transform_2(%arg0: i32, %arg1: i32) -> (i32, i32) {
    %c0_i32 = arith.constant 0 : i32
    %c0_i32_0 = arith.constant 0 : i32
    return %c0_i32, %arg1 : i32, i32
  }
  func.func @transform_3(%arg0: i32, %arg1: i32) -> (i32, i32) {
    %c0_i32 = arith.constant 0 : i32
    %c0_i32_0 = arith.constant 0 : i32
    %c0_i32_1 = arith.constant 0 : i32
    return %c0_i32, %c0_i32_0 : i32, i32
  }
  func.func @transform_4(%arg0: i32, %arg1: i32) -> (i32, i32) {
    %c0_i32 = arith.constant 0 : i32
    %c0_i32_0 = arith.constant 0 : i32
    %c0_i32_1 = arith.constant 0 : i32
    return %c0_i32, %c0_i32_0 : i32, i32
  }
  func.func @transform_5(%arg0: i32, %arg1: i32) -> (i32, i32) {
    %c0_i32 = arith.constant 0 : i32
    %c0_i32_0 = arith.constant 0 : i32
    return %arg0, %c0_i32 : i32, i32
  }
  func.func @transform_6(%arg0: i32, %arg1: i32) -> (i32, i32) {
    %c0_i32 = arith.constant 0 : i32
    return %arg0, %arg1 : i32, i32
  }
  func.func @transform_7(%arg0: i32, %arg1: i32) -> (i32, i32) {
    %c0_i32 = arith.constant 0 : i32
    %c0_i32_0 = arith.constant 0 : i32
    return %arg0, %c0_i32 : i32, i32
  }
}

</mosaic_0001>

<llo_original>
// kernel: seq_copy_generator_forward.4
$region0: #{seq_copy_generator_forward.4}
  #allocation0 [shape = 'u32[]', space=smem, size = 0x4, offset = 0x4, fixed_abs, tag = 'smem constant byte address 0x4 - core index']
  #allocation1 [shape = 'u32[144,128]{1,0:T(1,128)}', space=vmem, size = 0x12000, scoped, tag = 'internal scratch']
  %s0 = inlined_call_operand.vmem [shape: f32[16,32], index: 0, kind: input, shape index: {}]
  %s1 = inlined_call_operand.vmem [shape: bf16[32,128], index: 1, kind: input, shape index: {}]
  %s2 = inlined_call_operand.vmem [shape: f32[1,128], index: 2, kind: input, shape index: {}]
  %s3 = inlined_call_operand.vmem [shape: f32[16,128], index: 3, kind: output, shape index: {}]
  %s4 = sld [smem:[#allocation0]]
  $region45: #{seq_copy_generator_forward.4} parent=0
    _
  %s6 = ssub.s32 1, %s4
  %s7 = scalar_select 0, %s6, %s4
  loop: start=0, step=1, limit=4
  $region2: #{seq_copy_generator_forward.4} parent=0 // loop_pre_header
    _
  $region3: #{seq_copy_generator_forward.4} parent=0 // loop_header
    %s9 = sphi 0, %s13
    %p10 = scmp.ge.s32.totalorder %s9, 4
    %s19 = sphi 0, %s21
    %s22 = sphi 0, %s19
    %s23 = sphi 0, %s22
    %s39 = sphi 0, %s23
    %s43 = sphi 0, %s43
    %s45 = sphi 0, %s43
    %s46 = sphi 0, %s45
    %s60 = sphi 0, %s46
    %s64 = sphi 0, %s64
    %s66 = sphi 0, %s64
    %s67 = sphi 0, %s66
    %s81 = sphi 0, %s67
    %s87 = sphi 0, %s89
    %s90 = sphi 0, %s87
    %s91 = sphi 0, %s90
    %s107 = sphi 0, %s91
  $region4: #{seq_copy_generator_forward.4} parent=0 // loop_header_branch
    %12 = sbr.rel (%p10) target = $region8
  $region5: #{seq_copy_generator_forward.4} parent=0 // loop_body
    %s14 = ssub.s32 %s9, 1
    %s15 = ssub.s32 %s9, 2
    %s16 = sadd.s32 %s9, 1
    %s17 = ssub.s32 %s9, %s16
    %p18 = scmp.eq.s32.totalorder %s17, 0
    %s20 = sadd.s32 %s19, 1
    %s21 = scalar_select %p18, %s19, %s20
    %p24 = pneg %p18
    %p25 = scmp.eq.s32.totalorder %s9, 1
    %p26 = por %p24, %p25
    %p27 = scmp.ne.s32.totalorder %s19, %s22
    %p28 = scmp.eq.s32.totalorder %s9, 0
    %p29 = por %p27, %p28
    %p30 = scmp.ne.s32.totalorder %s19, %s22
    %p31 = scmp.eq.s32.totalorder %s14, 1
    %p32 = por %p30, %p31
    %p33 = scmp.ne.s32.totalorder %s22, %s23
    %p34 = scmp.eq.s32.totalorder %s14, 0
    %p35 = por %p33, %p34
    %p36 = scmp.ne.s32.totalorder %s22, %s23
    %p37 = scmp.eq.s32.totalorder %s15, 1
    %p38 = por %p36, %p37
    %p40 = scmp.ne.s32.totalorder %s23, %s39
    %p41 = scmp.eq.s32.totalorder %s15, 0
    %p42 = por %p40, %p41
    %s44 = sadd.s32 %s43, 1
    %p47 = scmp.eq.s32.totalorder %s9, 1
    %p48 = scmp.ne.s32.totalorder %s43, %s45
    %p49 = scmp.eq.s32.totalorder %s9, 0
    %p50 = por %p48, %p49
    %p51 = scmp.ne.s32.totalorder %s43, %s45
    %p52 = scmp.eq.s32.totalorder %s14, 1
    %p53 = por %p51, %p52
    %p54 = scmp.ne.s32.totalorder %s45, %s46
    %p55 = scmp.eq.s32.totalorder %s14, 0
    %p56 = por %p54, %p55
    %p57 = scmp.ne.s32.totalorder %s45, %s46
    %p58 = scmp.eq.s32.totalorder %s15, 1
    %p59 = por %p57, %p58
    %p61 = scmp.ne.s32.totalorder %s46, %s60
    %p62 = scmp.eq.s32.totalorder %s15, 0
    %p63 = por %p61, %p62
    %s65 = sadd.s32 %s64, 1
    %p68 = scmp.eq.s32.totalorder %s9, 1
    %p69 = scmp.ne.s32.totalorder %s64, %s66
    %p70 = scmp.eq.s32.totalorder %s9, 0
    %p71 = por %p69, %p70
    %p72 = scmp.ne.s32.totalorder %s64, %s66
    %p73 = scmp.eq.s32.totalorder %s14, 1
    %p74 = por %p72, %p73
    %p75 = scmp.ne.s32.totalorder %s66, %s67
    %p76 = scmp.eq.s32.totalorder %s14, 0
    %p77 = por %p75, %p76
    %p78 = scmp.ne.s32.totalorder %s66, %s67
    %p79 = scmp.eq.s32.totalorder %s15, 1
    %p80 = por %p78, %p79
    %p82 = scmp.ne.s32.totalorder %s67, %s81
    %p83 = scmp.eq.s32.totalorder %s15, 0
    %p84 = por %p82, %p83
    %s85 = ssub.s32 %s9, %s16
    %p86 = scmp.eq.s32.totalorder %s85, 0
    %s88 = sadd.s32 %s87, 1
    %s89 = scalar_select %p86, %s87, %s88
    %p92 = pneg %p86
    %p93 = scmp.eq.s32.totalorder %s9, 1
    %p94 = por %p92, %p93
    %p95 = scmp.ne.s32.totalorder %s87, %s90
    %p96 = scmp.eq.s32.totalorder %s9, 0
    %p97 = por %p95, %p96
    %p98 = scmp.ne.s32.totalorder %s87, %s90
    %p99 = scmp.eq.s32.totalorder %s14, 1
    %p100 = por %p98, %p99
    %p101 = scmp.ne.s32.totalorder %s90, %s91
    %p102 = scmp.eq.s32.totalorder %s14, 0
    %p103 = por %p101, %p102
    %p104 = scmp.ne.s32.totalorder %s90, %s91
    %p105 = scmp.eq.s32.totalorder %s15, 1
    %p106 = por %p104, %p105
    %p108 = scmp.ne.s32.totalorder %s91, %s107
    %p109 = scmp.eq.s32.totalorder %s15, 0
    %p110 = por %p108, %p109
    %p111 = scmp.le.s32.totalorder 1, %s9
    %p112 = scmp.lt.s32.totalorder %s9, 3
    %p113 = pnand %p111, %p112
    %p114 = pneg %p113
    // Predicated region
    $region9: #{seq_copy_generator_forward.4} parent=5 // pred_check
      _
    $region10: #{seq_copy_generator_forward.4} parent=5 // pred_check_branch
      %116 = sbr.rel (%p113) target = $region12
    $region11: #{seq_copy_generator_forward.4} parent=5 // pred_region
      %s117 = ssub.s32 %s9, 1
      // Predicated region
      $region13: #{seq_copy_generator_forward.4} parent=11 // pred_check
        %p118 = pneg %p56
      $region14: #{seq_copy_generator_forward.4} parent=11 // pred_check_branch
        %120 = sbr.rel (%p118) target = $region16
      $region15: #{seq_copy_generator_forward.4} parent=11 // pred_region
        _
      $region16: #{seq_copy_generator_forward.4} parent=11 // pred_fallthru
        _
      // Predicated region
      $region17: #{seq_copy_generator_forward.4} parent=11 // pred_check
        %p121 = pneg %p77
      $region18: #{seq_copy_generator_forward.4} parent=11 // pred_check_branch
        %123 = sbr.rel (%p121) target = $region20
      $region19: #{seq_copy_generator_forward.4} parent=11 // pred_region
        _
      $region20: #{seq_copy_generator_forward.4} parent=11 // pred_fallthru
        _
    $region12: #{seq_copy_generator_forward.4} parent=5 // pred_fallthru
      _
    %p124 = scmp.lt.s32.totalorder %s9, 2
    // Predicated region
    $region21: #{seq_copy_generator_forward.4} parent=5 // pred_check
      %p125 = pneg %p124
    $region22: #{seq_copy_generator_forward.4} parent=5 // pred_check_branch
      %127 = sbr.rel (%p125) target = $region24
    $region23: #{seq_copy_generator_forward.4} parent=5 // pred_region
      // Predicated region
      $region25: #{seq_copy_generator_forward.4} parent=23 // pred_check
        %p128 = pneg %p29
      $region26: #{seq_copy_generator_forward.4} parent=23 // pred_check_branch
        %130 = sbr.rel (%p128) target = $region28
      $region27: #{seq_copy_generator_forward.4} parent=23 // pred_region
        %p131 = scmp.lt.s32.totalorder %s9, 1
        %s132 = scalar_select %p131, %s9, 1
        %s133 = smul.addr %s132, 8
        %s134 = scalar_lea.vmem %s0, %s133
      $region28: #{seq_copy_generator_forward.4} parent=23 // pred_fallthru
        _
    $region24: #{seq_copy_generator_forward.4} parent=5 // pred_fallthru
      _
    %p135 = scmp.le.s32.totalorder 1, %s9
    %p136 = scmp.lt.s32.totalorder %s9, 3
    %p137 = pnand %p135, %p136
    %p138 = pneg %p137
    // Predicated region
    $region29: #{seq_copy_generator_forward.4} parent=5 // pred_check
      _
    $region30: #{seq_copy_generator_forward.4} parent=5 // pred_check_branch
      %140 = sbr.rel (%p137) target = $region32
    $region31: #{seq_copy_generator_forward.4} parent=5 // pred_region
      %s141 = ssub.s32 %s9, 1
      %p142 = scmp.lt.s32.totalorder %s14, 1
      %s143 = scalar_select %p142, %s14, 1
      %s144 = smul.addr %s143, 8
      %s145 = scalar_lea.vmem %s0, %s144
      %p146 = pneg %p35
      %p147 = pneg %p32
      %p148 = pneg %p56
      %p149 = pneg %p53
      %p150 = pneg %p77
      %p151 = pneg %p74
      %p152 = pneg %p103
      %p153 = pneg %p100
      %p154 = scmp.lt.s32.totalorder %s14, 1
      %s155 = scalar_select %p154, %s14, 1
      %s156 = smul.addr %s155, 8
      %s157 = scalar_lea.vmem %s3, %s156
      %p158 = scmp.lt.s32.totalorder %s14, 1
      %s159 = scalar_select %p158, %s14, 1
      %s160 = smul.addr %s159, 8
      %s161 = scalar_lea.vmem %s0, %s160
      %p162 = scmp.lt.s32.totalorder %s14, 1
      %s163 = scalar_select %p162, %s14, 1
      %s164 = smul.addr %s163, 8
      %s165 = scalar_lea.vmem %s3, %s164
      %v167 = vld [vmem:[%s161] sm:$0xff]
      %v168 = vpack.c.bf16 %v167, %v167
      %v169 = vld [vmem:[%s1] sm:$0xf]
      %v170 = vld [vmem:[%s1 + $0x4] sm:$0xf]
      %v171 = vld [vmem:[%s1 + $0x8] sm:$0xf]
      %v172 = vld [vmem:[%s1 + $0xc] sm:$0xf]
      %v173 = vld [vmem:[%s2] sm:$0x1]
      %v175 = vlaneseq
      %v176 = vshrl.u32 %v175, 7
      %v177 = vsub.s32 0, %v176
      %v178 = vrot.slane %v173, %v177
      %v184 = vunpack.c.l.b16 %v169
      %v185 = vunpack.c.l.b16 %v170
      %v186 = vunpack.c.l.b16 %v171
      %v187 = vunpack.c.l.b16 %v172
      %v188 = vpack.c.b16 %v185, %v184
      %v189 = vpack.c.b16 %v187, %v186
      %vm192 = vcmask 261120
      %v194 = vsel %vm192, %v168, 0
      %196 = vmatprep.subr.bf16.mxu0 0
      %197 = vmatpush1.bf16.msra.mxu0 %v188
      %198 = vmatprep.subr.bf16.mxu0 0
      %199 = vmatpush1.bf16.msra.mxu0 %v189
      %200 = vmatprep.subr.bf16.mxu0 0
      %201 = vmatpush1.bf16.msra.mxu0 0
      %202 = vmatprep.subr.bf16.mxu0 0
      %203 = vmatpush1.bf16.msra.mxu0 0
      %204 = vmatprep.subr.bf16.mxu0 0
      %205 = vmatpush1.bf16.msra.mxu0 0
      %206 = vmatprep.subr.bf16.mxu0 0
      %207 = vmatpush1.bf16.msra.mxu0 0
      %208 = vmatprep.subr.bf16.mxu0 0
      %209 = vmatpush1.bf16.msra.mxu0 0
      %210 = vmatprep.subr.bf16.mxu0 0
      %211 = vmatpush1.bf16.msra.mxu0 0
      %212 = vmatprep.subr.bf16.mxu0 0
      %213 = vmatpush1.bf16.msra.mxu0 0
      %214 = vmatprep.subr.bf16.mxu0 0
      %215 = vmatpush1.bf16.msra.mxu0 0
      %216 = vmatprep.subr.bf16.mxu0 0
      %217 = vmatpush1.bf16.msra.mxu0 0
      %218 = vmatprep.subr.bf16.mxu0 0
      %219 = vmatpush1.bf16.msra.mxu0 0
      %220 = vmatprep.subr.bf16.mxu0 0
      %221 = vmatpush1.bf16.msra.mxu0 0
      %222 = vmatprep.subr.bf16.mxu0 0
      %223 = vmatpush1.bf16.msra.mxu0 0
      %224 = vmatprep.subr.bf16.mxu0 0
      %225 = vmatpush1.bf16.msra.mxu0 0
      %226 = vmatprep.subr.bf16.mxu0 0
      %227 = vmatpush1.bf16.msra.mxu0 0
      %228 = vmatprep.mubr.bf16.mxu0 0
      %229 = vmatmul.mubr.bf16.gmra.mrb[0].mxu0 %v194
      %v230 = vpop.f32.mrb[0].mxu0
      %v231 = vadd.f32 %v178, %v230
      %v232 = vpop.f32.mrb[0].mxu0
      %v233 = vpop.f32.mrb[0].mxu0
      %v234 = vpop.f32.mrb[0].mxu0
      %235 = vdwg.mxu0
      %236 = vst [vmem:[%s165] sm:$0xff] %v231
      %p237 = scmp.lt.s32.totalorder %s14, 1
      %s238 = scalar_select %p237, %s14, 1
      %s239 = smul.addr %s238, 8
      %s240 = scalar_lea.vmem %s3, %s239
      // Predicated region
      $region33: #{seq_copy_generator_forward.4} parent=31 // pred_check
        %p241 = pneg %p100
      $region34: #{seq_copy_generator_forward.4} parent=31 // pred_check_branch
        %243 = sbr.rel (%p241) target = $region36
      $region35: #{seq_copy_generator_forward.4} parent=31 // pred_region
        _
      $region36: #{seq_copy_generator_forward.4} parent=31 // pred_fallthru
        _
    $region32: #{seq_copy_generator_forward.4} parent=5 // pred_fallthru
      _
    %p244 = scmp.le.s32.totalorder 2, %s9
    // Predicated region
    $region37: #{seq_copy_generator_forward.4} parent=5 // pred_check
      %p245 = pneg %p244
    $region38: #{seq_copy_generator_forward.4} parent=5 // pred_check_branch
      %247 = sbr.rel (%p245) target = $region40
    $region39: #{seq_copy_generator_forward.4} parent=5 // pred_region
      %s248 = ssub.s32 %s9, 2
      // Predicated region
      $region41: #{seq_copy_generator_forward.4} parent=39 // pred_check
        %p249 = pneg %p106
      $region42: #{seq_copy_generator_forward.4} parent=39 // pred_check_branch
        %251 = sbr.rel (%p249) target = $region44
      $region43: #{seq_copy_generator_forward.4} parent=39 // pred_region
        %p252 = scmp.lt.s32.totalorder %s15, 1
        %s253 = scalar_select %p252, %s15, 1
        %s254 = smul.addr %s253, 8
        %s255 = scalar_lea.vmem %s3, %s254
      $region44: #{seq_copy_generator_forward.4} parent=39 // pred_fallthru
        _
    $region40: #{seq_copy_generator_forward.4} parent=5 // pred_fallthru
      _
  $region6: #{seq_copy_generator_forward.4} parent=0 // loop_footer
    %s13 = sadd.s32 1, %s9
  $region7: #{seq_copy_generator_forward.4} parent=0 // loop_footer_branch
    %8 = sbr.rel target = $region3
  $region8: #{seq_copy_generator_forward.4} parent=0 // loop_exit
    _

// kernel: seq_copy_generator_forward.7
$region0: #{seq_copy_generator_forward.7}
  #allocation0 [shape = 'u32[]', space=smem, size = 0x4, offset = 0x4, fixed_abs, tag = 'smem constant byte address 0x4 - core index']
  #allocation1 [shape = 'u32[144,128]{1,0:T(1,128)}', space=vmem, size = 0x12000, scoped, tag = 'internal scratch']
  %s0 = inlined_call_operand.vmem [shape: f32[16,128], index: 0, kind: input, shape index: {}, may-alias: {0,2}]
  %s1 = inlined_call_operand.vmem [shape: f32[16,1], index: 1, kind: input, shape index: {}]
  %s2 = inlined_call_operand.vmem [shape: f32[16,128], index: 2, kind: output, shape index: {}, may-alias: {0,2}]
  %s3 = sld [smem:[#allocation0]]
  $region41: #{seq_copy_generator_forward.7} parent=0
    _
  %s5 = ssub.s32 1, %s3
  %s6 = scalar_select 0, %s5, %s3
  loop: start=0, step=1, limit=4
  $region2: #{seq_copy_generator_forward.7} parent=0 // loop_pre_header
    _
  $region3: #{seq_copy_generator_forward.7} parent=0 // loop_header
    %s8 = sphi 0, %s12
    %p9 = scmp.ge.s32.totalorder %s8, 4
    %s15 = sphi 0, %s27
    %s16 = sphi 0, %s23
    %s17 = sphi 0, %s15
    %s18 = sphi 0, %s16
    %s19 = sphi 0, %s17
    %s20 = sphi 0, %s18
    %s32 = sphi 0, %s34
    %s35 = sphi 0, %s32
    %s36 = sphi 0, %s35
    %s52 = sphi 0, %s36
    %s58 = sphi 0, %s60
    %s61 = sphi 0, %s58
    %s62 = sphi 0, %s61
    %s78 = sphi 0, %s62
    %s86 = sphi 0, %s88
    %s89 = sphi 0, %s86
    %s90 = sphi 0, %s89
    %s106 = sphi 0, %s90
  $region4: #{seq_copy_generator_forward.7} parent=0 // loop_header_branch
    %11 = sbr.rel (%p9) target = $region8
  $region5: #{seq_copy_generator_forward.7} parent=0 // loop_body
    %s13 = ssub.s32 %s8, 1
    %s14 = ssub.s32 %s8, 2
    %s21 = sadd.s32 1, %s16
    %p22 = scmp.ge.s32.totalorder %s21, 1
    %s23 = scalar_select %p22, 0, %s21
    %s24 = sadd.s32 1, %s15
    %s25 = scalar_select %p22, %s24, %s15
    %p26 = scmp.ge.s32.totalorder %s25, 2
    %s27 = scalar_select %p26, 0, %s25
    %s28 = ssub.s32 %s15, %s27
    %s29 = ssub.s32 %s16, %s23
    %s30 = sor.u32 %s28, %s29
    %p31 = scmp.eq.s32.totalorder %s30, 0
    %s33 = sadd.s32 %s32, 1
    %s34 = scalar_select %p31, %s32, %s33
    %p37 = pneg %p31
    %p38 = scmp.eq.s32.totalorder %s8, 1
    %p39 = por %p37, %p38
    %p40 = scmp.ne.s32.totalorder %s32, %s35
    %p41 = scmp.eq.s32.totalorder %s8, 0
    %p42 = por %p40, %p41
    %p43 = scmp.ne.s32.totalorder %s32, %s35
    %p44 = scmp.eq.s32.totalorder %s13, 1
    %p45 = por %p43, %p44
    %p46 = scmp.ne.s32.totalorder %s35, %s36
    %p47 = scmp.eq.s32.totalorder %s13, 0
    %p48 = por %p46, %p47
    %p49 = scmp.ne.s32.totalorder %s35, %s36
    %p50 = scmp.eq.s32.totalorder %s14, 1
    %p51 = por %p49, %p50
    %p53 = scmp.ne.s32.totalorder %s36, %s52
    %p54 = scmp.eq.s32.totalorder %s14, 0
    %p55 = por %p53, %p54
    %s56 = ssub.s32 %s15, %s27
    %p57 = scmp.eq.s32.totalorder %s56, 0
    %s59 = sadd.s32 %s58, 1
    %s60 = scalar_select %p57, %s58, %s59
    %p63 = pneg %p57
    %p64 = scmp.eq.s32.totalorder %s8, 1
    %p65 = por %p63, %p64
    %p66 = scmp.ne.s32.totalorder %s58, %s61
    %p67 = scmp.eq.s32.totalorder %s8, 0
    %p68 = por %p66, %p67
    %p69 = scmp.ne.s32.totalorder %s58, %s61
    %p70 = scmp.eq.s32.totalorder %s13, 1
    %p71 = por %p69, %p70
    %p72 = scmp.ne.s32.totalorder %s61, %s62
    %p73 = scmp.eq.s32.totalorder %s13, 0
    %p74 = por %p72, %p73
    %p75 = scmp.ne.s32.totalorder %s61, %s62
    %p76 = scmp.eq.s32.totalorder %s14, 1
    %p77 = por %p75, %p76
    %p79 = scmp.ne.s32.totalorder %s62, %s78
    %p80 = scmp.eq.s32.totalorder %s14, 0
    %p81 = por %p79, %p80
    %s82 = ssub.s32 %s15, %s27
    %s83 = ssub.s32 %s16, %s23
    %s84 = sor.u32 %s82, %s83
    %p85 = scmp.eq.s32.totalorder %s84, 0
    %s87 = sadd.s32 %s86, 1
    %s88 = scalar_select %p85, %s86, %s87
    %p91 = pneg %p85
    %p92 = scmp.eq.s32.totalorder %s8, 1
    %p93 = por %p91, %p92
    %p94 = scmp.ne.s32.totalorder %s86, %s89
    %p95 = scmp.eq.s32.totalorder %s8, 0
    %p96 = por %p94, %p95
    %p97 = scmp.ne.s32.totalorder %s86, %s89
    %p98 = scmp.eq.s32.totalorder %s13, 1
    %p99 = por %p97, %p98
    %p100 = scmp.ne.s32.totalorder %s89, %s90
    %p101 = scmp.eq.s32.totalorder %s13, 0
    %p102 = por %p100, %p101
    %p103 = scmp.ne.s32.totalorder %s89, %s90
    %p104 = scmp.eq.s32.totalorder %s14, 1
    %p105 = por %p103, %p104
    %p107 = scmp.ne.s32.totalorder %s90, %s106
    %p108 = scmp.eq.s32.totalorder %s14, 0
    %p109 = por %p107, %p108
    %p110 = scmp.le.s32.totalorder 1, %s8
    %p111 = scmp.lt.s32.totalorder %s8, 3
    %p112 = pnand %p110, %p111
    %p113 = pneg %p112
    // Predicated region
    $region9: #{seq_copy_generator_forward.7} parent=5 // pred_check
      _
    $region10: #{seq_copy_generator_forward.7} parent=5 // pred_check_branch
      %115 = sbr.rel (%p112) target = $region12
    $region11: #{seq_copy_generator_forward.7} parent=5 // pred_region
      %s116 = ssub.s32 %s8, 1
    $region12: #{seq_copy_generator_forward.7} parent=5 // pred_fallthru
      _
    %p117 = scmp.lt.s32.totalorder %s8, 2
    // Predicated region
    $region13: #{seq_copy_generator_forward.7} parent=5 // pred_check
      %p118 = pneg %p117
    $region14: #{seq_copy_generator_forward.7} parent=5 // pred_check_branch
      %120 = sbr.rel (%p118) target = $region16
    $region15: #{seq_copy_generator_forward.7} parent=5 // pred_region
      // Predicated region
      $region17: #{seq_copy_generator_forward.7} parent=15 // pred_check
        %p121 = pneg %p42
      $region18: #{seq_copy_generator_forward.7} parent=15 // pred_check_branch
        %123 = sbr.rel (%p121) target = $region20
      $region19: #{seq_copy_generator_forward.7} parent=15 // pred_region
        %p124 = scmp.lt.s32.totalorder %s15, 1
        %s125 = scalar_select %p124, %s15, 1
        %p126 = scmp.lt.s32.totalorder %s16, 0
        %s127 = scalar_select %p126, %s16, 0
        %s128 = sadd.s32 %s127, %s125
        %s129 = smul.addr %s128, 8
        %s130 = scalar_lea.vmem %s0, %s129
      $region20: #{seq_copy_generator_forward.7} parent=15 // pred_fallthru
        _
      // Predicated region
      $region21: #{seq_copy_generator_forward.7} parent=15 // pred_check
        %p131 = pneg %p68
      $region22: #{seq_copy_generator_forward.7} parent=15 // pred_check_branch
        %133 = sbr.rel (%p131) target = $region24
      $region23: #{seq_copy_generator_forward.7} parent=15 // pred_region
        %p134 = scmp.lt.s32.totalorder %s15, 1
        %s135 = scalar_select %p134, %s15, 1
        %s136 = smul.addr %s135, 8
        %s137 = scalar_lea.vmem %s1, %s136
      $region24: #{seq_copy_generator_forward.7} parent=15 // pred_fallthru
        _
    $region16: #{seq_copy_generator_forward.7} parent=5 // pred_fallthru
      _
    %p138 = scmp.le.s32.totalorder 1, %s8
    %p139 = scmp.lt.s32.totalorder %s8, 3
    %p140 = pnand %p138, %p139
    %p141 = pneg %p140
    // Predicated region
    $region25: #{seq_copy_generator_forward.7} parent=5 // pred_check
      _
    $region26: #{seq_copy_generator_forward.7} parent=5 // pred_check_branch
      %143 = sbr.rel (%p140) target = $region28
    $region27: #{seq_copy_generator_forward.7} parent=5 // pred_region
      %s144 = ssub.s32 %s8, 1
      %p145 = scmp.lt.s32.totalorder %s17, 1
      %s146 = scalar_select %p145, %s17, 1
      %p147 = scmp.lt.s32.totalorder %s18, 0
      %s148 = scalar_select %p147, %s18, 0
      %s149 = sadd.s32 %s148, %s146
      %s150 = smul.addr %s149, 8
      %s151 = scalar_lea.vmem %s0, %s150
      %p152 = pneg %p48
      %p153 = pneg %p45
      %p154 = scmp.lt.s32.totalorder %s17, 1
      %s155 = scalar_select %p154, %s17, 1
      %s156 = smul.addr %s155, 8
      %s157 = scalar_lea.vmem %s1, %s156
      %p158 = pneg %p74
      %p159 = pneg %p71
      %p160 = pneg %p102
      %p161 = pneg %p99
      %p162 = scmp.lt.s32.totalorder %s17, 1
      %s163 = scalar_select %p162, %s17, 1
      %p164 = scmp.lt.s32.totalorder %s18, 0
      %s165 = scalar_select %p164, %s18, 0
      %s166 = sadd.s32 %s165, %s163
      %s167 = smul.addr %s166, 8
      %s168 = scalar_lea.vmem %s2, %s167
      %p169 = scmp.lt.s32.totalorder %s17, 1
      %s170 = scalar_select %p169, %s17, 1
      %p171 = scmp.lt.s32.totalorder %s18, 0
      %s172 = scalar_select %p171, %s18, 0
      %s173 = sadd.s32 %s172, %s170
      %s174 = smul.addr %s173, 8
      %s175 = scalar_lea.vmem %s0, %s174
      %p176 = scmp.lt.s32.totalorder %s17, 1
      %s177 = scalar_select %p176, %s17, 1
      %s178 = smul.addr %s177, 8
      %s179 = scalar_lea.vmem %s1, %s178
      %p180 = scmp.lt.s32.totalorder %s17, 1
      %s181 = scalar_select %p180, %s17, 1
      %p182 = scmp.lt.s32.totalorder %s18, 0
      %s183 = scalar_select %p182, %s18, 0
      %s184 = sadd.s32 %s183, %s181
      %s185 = smul.addr %s184, 8
      %s186 = scalar_lea.vmem %s2, %s185
      %v187 = vld [vmem:[%s175] sm:$0xff]
      %v188 = vld [vmem:[%s179] sm:$0xff]
      %190 = vset.pattern.permute.xlu0 0
      %191 = vperm.xlu0 %190, %v188
      %v192 = vpop.permute.xlu0 %191
      %v194 = vsub.f32 %v187, %v192
      %v195 = vmax.f32 %v194, -27.631021
      %196 = vst [vmem:[%s186] sm:$0xff] %v195
      %p197 = scmp.lt.s32.totalorder %s17, 1
      %s198 = scalar_select %p197, %s17, 1
      %p199 = scmp.lt.s32.totalorder %s18, 0
      %s200 = scalar_select %p199, %s18, 0
      %s201 = sadd.s32 %s200, %s198
      %s202 = smul.addr %s201, 8
      %s203 = scalar_lea.vmem %s2, %s202
      // Predicated region
      $region29: #{seq_copy_generator_forward.7} parent=27 // pred_check
        %p204 = pneg %p99
      $region30: #{seq_copy_generator_forward.7} parent=27 // pred_check_branch
        %206 = sbr.rel (%p204) target = $region32
      $region31: #{seq_copy_generator_forward.7} parent=27 // pred_region
        _
      $region32: #{seq_copy_generator_forward.7} parent=27 // pred_fallthru
        _
    $region28: #{seq_copy_generator_forward.7} parent=5 // pred_fallthru
      _
    %p207 = scmp.le.s32.totalorder 2, %s8
    // Predicated region
    $region33: #{seq_copy_generator_forward.7} parent=5 // pred_check
      %p208 = pneg %p207
    $region34: #{seq_copy_generator_forward.7} parent=5 // pred_check_branch
      %210 = sbr.rel (%p208) target = $region36
    $region35: #{seq_copy_generator_forward.7} parent=5 // pred_region
      %s211 = ssub.s32 %s8, 2
      // Predicated region
      $region37: #{seq_copy_generator_forward.7} parent=35 // pred_check
        %p212 = pneg %p105
      $region38: #{seq_copy_generator_forward.7} parent=35 // pred_check_branch
        %214 = sbr.rel (%p212) target = $region40
      $region39: #{seq_copy_generator_forward.7} parent=35 // pred_region
        %p215 = scmp.lt.s32.totalorder %s19, 1
        %s216 = scalar_select %p215, %s19, 1
        %p217 = scmp.lt.s32.totalorder %s20, 0
        %s218 = scalar_select %p217, %s20, 0
        %s219 = sadd.s32 %s218, %s216
        %s220 = smul.addr %s219, 8
        %s221 = scalar_lea.vmem %s2, %s220
      $region40: #{seq_copy_generator_forward.7} parent=35 // pred_fallthru
        _
    $region36: #{seq_copy_generator_forward.7} parent=5 // pred_fallthru
      _
  $region6: #{seq_copy_generator_forward.7} parent=0 // loop_footer
    %s12 = sadd.s32 1, %s8
  $region7: #{seq_copy_generator_forward.7} parent=0 // loop_footer_branch
    %7 = sbr.rel target = $region3
  $region8: #{seq_copy_generator_forward.7} parent=0 // loop_exit
    _

// kernel: seq_copy_generator_forward.5
$region0: #{seq_copy_generator_forward.5}
  #allocation0 [shape = 'u32[]', space=smem, size = 0x4, offset = 0x4, fixed_abs, tag = 'smem constant byte address 0x4 - core index']
  #allocation1 [shape = 'u32[144,128]{1,0:T(1,128)}', space=vmem, size = 0x12000, scoped, tag = 'internal scratch']
  #allocation2 [shape = 'f32[2,16]{1,0:T(2,128)}', space=vmem, size = 0x400, scoped, tag = 'scratch operand']
  #allocation3 [shape = 'f32[2,16]{1,0:T(2,128)}', space=vmem, size = 0x400, scoped, tag = 'scratch operand']
  %s0 = inlined_call_operand.vmem [shape: f32[2,8,4,2,16], index: 0, kind: input, shape index: {}]
  %s1 = inlined_call_operand.vmem [shape: f32[8,2,1], index: 1, kind: input, shape index: {}]
  %s2 = inlined_call_operand.vmem [shape: f32[2,4,16,16], index: 2, kind: input, shape index: {}]
  %s3 = inlined_call_operand.vmem [shape: f32[2,8,2,16], index: 3, kind: output, shape index: {}]
  %s4 = sld [smem:[#allocation0]]
  $region52: #{seq_copy_generator_forward.5} parent=0
    _
  %s6 = ssub.s32 1, %s4
  %s7 = scalar_select 0, %s6, %s4
  loop: start=0, step=1, limit=4
  $region2: #{seq_copy_generator_forward.5} parent=0 // loop_pre_header
    _
  $region3: #{seq_copy_generator_forward.5} parent=0 // loop_header
    %s9 = sphi 0, %s13
    %p10 = scmp.ge.s32.totalorder %s9, 4
    %s19 = sphi 0, %s21
    %s22 = sphi 0, %s19
    %s23 = sphi 0, %s22
    %s39 = sphi 0, %s23
    %s43 = sphi 0, %s43
    %s45 = sphi 0, %s43
    %s46 = sphi 0, %s45
    %s60 = sphi 0, %s46
    %s66 = sphi 0, %s68
    %s69 = sphi 0, %s66
    %s70 = sphi 0, %s69
    %s86 = sphi 0, %s70
    %s92 = sphi 0, %s94
    %s95 = sphi 0, %s92
    %s96 = sphi 0, %s95
    %s112 = sphi 0, %s96
  $region4: #{seq_copy_generator_forward.5} parent=0 // loop_header_branch
    %12 = sbr.rel (%p10) target = $region8
  $region5: #{seq_copy_generator_forward.5} parent=0 // loop_body
    %s14 = ssub.s32 %s9, 1
    %s15 = ssub.s32 %s9, 2
    %s16 = sadd.s32 %s9, 1
    %s17 = ssub.s32 %s9, %s16
    %p18 = scmp.eq.s32.totalorder %s17, 0
    %s20 = sadd.s32 %s19, 1
    %s21 = scalar_select %p18, %s19, %s20
    %p24 = pneg %p18
    %p25 = scmp.eq.s32.totalorder %s9, 1
    %p26 = por %p24, %p25
    %p27 = scmp.ne.s32.totalorder %s19, %s22
    %p28 = scmp.eq.s32.totalorder %s9, 0
    %p29 = por %p27, %p28
    %p30 = scmp.ne.s32.totalorder %s19, %s22
    %p31 = scmp.eq.s32.totalorder %s14, 1
    %p32 = por %p30, %p31
    %p33 = scmp.ne.s32.totalorder %s22, %s23
    %p34 = scmp.eq.s32.totalorder %s14, 0
    %p35 = por %p33, %p34
    %p36 = scmp.ne.s32.totalorder %s22, %s23
    %p37 = scmp.eq.s32.totalorder %s15, 1
    %p38 = por %p36, %p37
    %p40 = scmp.ne.s32.totalorder %s23, %s39
    %p41 = scmp.eq.s32.totalorder %s15, 0
    %p42 = por %p40, %p41
    %s44 = sadd.s32 %s43, 1
    %p47 = scmp.eq.s32.totalorder %s9, 1
    %p48 = scmp.ne.s32.totalorder %s43, %s45
    %p49 = scmp.eq.s32.totalorder %s9, 0
    %p50 = por %p48, %p49
    %p51 = scmp.ne.s32.totalorder %s43, %s45
    %p52 = scmp.eq.s32.totalorder %s14, 1
    %p53 = por %p51, %p52
    %p54 = scmp.ne.s32.totalorder %s45, %s46
    %p55 = scmp.eq.s32.totalorder %s14, 0
    %p56 = por %p54, %p55
    %p57 = scmp.ne.s32.totalorder %s45, %s46
    %p58 = scmp.eq.s32.totalorder %s15, 1
    %p59 = por %p57, %p58
    %p61 = scmp.ne.s32.totalorder %s46, %s60
    %p62 = scmp.eq.s32.totalorder %s15, 0
    %p63 = por %p61, %p62
    %s64 = ssub.s32 %s9, %s16
    %p65 = scmp.eq.s32.totalorder %s64, 0
    %s67 = sadd.s32 %s66, 1
    %s68 = scalar_select %p65, %s66, %s67
    %p71 = pneg %p65
    %p72 = scmp.eq.s32.totalorder %s9, 1
    %p73 = por %p71, %p72
    %p74 = scmp.ne.s32.totalorder %s66, %s69
    %p75 = scmp.eq.s32.totalorder %s9, 0
    %p76 = por %p74, %p75
    %p77 = scmp.ne.s32.totalorder %s66, %s69
    %p78 = scmp.eq.s32.totalorder %s14, 1
    %p79 = por %p77, %p78
    %p80 = scmp.ne.s32.totalorder %s69, %s70
    %p81 = scmp.eq.s32.totalorder %s14, 0
    %p82 = por %p80, %p81
    %p83 = scmp.ne.s32.totalorder %s69, %s70
    %p84 = scmp.eq.s32.totalorder %s15, 1
    %p85 = por %p83, %p84
    %p87 = scmp.ne.s32.totalorder %s70, %s86
    %p88 = scmp.eq.s32.totalorder %s15, 0
    %p89 = por %p87, %p88
    %s90 = ssub.s32 %s9, %s16
    %p91 = scmp.eq.s32.totalorder %s90, 0
    %s93 = sadd.s32 %s92, 1
    %s94 = scalar_select %p91, %s92, %s93
    %p97 = pneg %p91
    %p98 = scmp.eq.s32.totalorder %s9, 1
    %p99 = por %p97, %p98
    %p100 = scmp.ne.s32.totalorder %s92, %s95
    %p101 = scmp.eq.s32.totalorder %s9, 0
    %p102 = por %p100, %p101
    %p103 = scmp.ne.s32.totalorder %s92, %s95
    %p104 = scmp.eq.s32.totalorder %s14, 1
    %p105 = por %p103, %p104
    %p106 = scmp.ne.s32.totalorder %s95, %s96
    %p107 = scmp.eq.s32.totalorder %s14, 0
    %p108 = por %p106, %p107
    %p109 = scmp.ne.s32.totalorder %s95, %s96
    %p110 = scmp.eq.s32.totalorder %s15, 1
    %p111 = por %p109, %p110
    %p113 = scmp.ne.s32.totalorder %s96, %s112
    %p114 = scmp.eq.s32.totalorder %s15, 0
    %p115 = por %p113, %p114
    %p116 = scmp.le.s32.totalorder 1, %s9
    %p117 = scmp.lt.s32.totalorder %s9, 3
    %p118 = pnand %p116, %p117
    %p119 = pneg %p118
    // Predicated region
    $region9: #{seq_copy_generator_forward.5} parent=5 // pred_check
      _
    $region10: #{seq_copy_generator_forward.5} parent=5 // pred_check_branch
      %121 = sbr.rel (%p118) target = $region12
    $region11: #{seq_copy_generator_forward.5} parent=5 // pred_region
      %s122 = ssub.s32 %s9, 1
      // Predicated region
      $region13: #{seq_copy_generator_forward.5} parent=11 // pred_check
        %p123 = pneg %p56
      $region14: #{seq_copy_generator_forward.5} parent=11 // pred_check_branch
        %125 = sbr.rel (%p123) target = $region16
      $region15: #{seq_copy_generator_forward.5} parent=11 // pred_region
        _
      $region16: #{seq_copy_generator_forward.5} parent=11 // pred_fallthru
        _
    $region12: #{seq_copy_generator_forward.5} parent=5 // pred_fallthru
      _
    %p126 = scmp.lt.s32.totalorder %s9, 2
    // Predicated region
    $region17: #{seq_copy_generator_forward.5} parent=5 // pred_check
      %p127 = pneg %p126
    $region18: #{seq_copy_generator_forward.5} parent=5 // pred_check_branch
      %129 = sbr.rel (%p127) target = $region20
    $region19: #{seq_copy_generator_forward.5} parent=5 // pred_region
      // Predicated region
      $region21: #{seq_copy_generator_forward.5} parent=19 // pred_check
        %p130 = pneg %p29
      $region22: #{seq_copy_generator_forward.5} parent=19 // pred_check_branch
        %132 = sbr.rel (%p130) target = $region24
      $region23: #{seq_copy_generator_forward.5} parent=19 // pred_region
        %p133 = scmp.lt.s32.totalorder %s9, 1
        %s134 = scalar_select %p133, %s9, 1
        %s135 = smul.addr %s134, 32
        %s136 = smul.addr %s135, 2
        %s137 = scalar_lea.vmem %s0, %s136
      $region24: #{seq_copy_generator_forward.5} parent=19 // pred_fallthru
        _
      // Predicated region
      $region25: #{seq_copy_generator_forward.5} parent=19 // pred_check
        %p138 = pneg %p76
      $region26: #{seq_copy_generator_forward.5} parent=19 // pred_check_branch
        %140 = sbr.rel (%p138) target = $region28
      $region27: #{seq_copy_generator_forward.5} parent=19 // pred_region
        %p141 = scmp.lt.s32.totalorder %s9, 1
        %s142 = scalar_select %p141, %s9, 1
        %s143 = smul.addr %s142, 8
        %s144 = smul.addr %s143, 8
        %s145 = scalar_lea.vmem %s2, %s144
      $region28: #{seq_copy_generator_forward.5} parent=19 // pred_fallthru
        _
    $region20: #{seq_copy_generator_forward.5} parent=5 // pred_fallthru
      _
    %p146 = scmp.le.s32.totalorder 1, %s9
    %p147 = scmp.lt.s32.totalorder %s9, 3
    %p148 = pnand %p146, %p147
    %p149 = pneg %p148
    // Predicated region
    $region29: #{seq_copy_generator_forward.5} parent=5 // pred_check
      _
    $region30: #{seq_copy_generator_forward.5} parent=5 // pred_check_branch
      %151 = sbr.rel (%p148) target = $region32
    $region31: #{seq_copy_generator_forward.5} parent=5 // pred_region
      %s152 = ssub.s32 %s9, 1
      %p153 = scmp.lt.s32.totalorder %s14, 1
      %s154 = scalar_select %p153, %s14, 1
      %s155 = smul.addr %s154, 32
      %s156 = smul.addr %s155, 2
      %s157 = scalar_lea.vmem %s0, %s156
      %p158 = pneg %p35
      %p159 = pneg %p32
      %p160 = pneg %p56
      %p161 = pneg %p53
      %p162 = scmp.lt.s32.totalorder %s14, 1
      %s163 = scalar_select %p162, %s14, 1
      %s164 = smul.addr %s163, 8
      %s165 = smul.addr %s164, 8
      %s166 = scalar_lea.vmem %s2, %s165
      %p167 = pneg %p82
      %p168 = pneg %p79
      %p169 = pneg %p108
      %p170 = pneg %p105
      %p171 = scmp.lt.s32.totalorder %s14, 1
      %s172 = scalar_select %p171, %s14, 1
      %s173 = smul.addr %s172, 8
      %s174 = smul.addr %s173, 2
      %s175 = scalar_lea.vmem %s3, %s174
      %p176 = scmp.lt.s32.totalorder %s14, 1
      %s177 = scalar_select %p176, %s14, 1
      %s178 = smul.addr %s177, 32
      %s179 = smul.addr %s178, 2
      %s180 = scalar_lea.vmem %s0, %s179
      %p181 = scmp.lt.s32.totalorder %s14, 1
      %s182 = scalar_select %p181, %s14, 1
      %s183 = smul.addr %s182, 8
      %s184 = smul.addr %s183, 8
      %s185 = scalar_lea.vmem %s2, %s184
      %p186 = scmp.lt.s32.totalorder %s14, 1
      %s187 = scalar_select %p186, %s14, 1
      %s188 = smul.addr %s187, 8
      %s189 = smul.addr %s188, 2
      %s190 = scalar_lea.vmem %s3, %s189
      %vm192 = vcmask 123904
      %193 = vst.msk [vmem:[#allocation2] sm:$0x3] %vm192, 0.0
      %194 = vst.msk [vmem:[#allocation3] sm:$0x3] %vm192, 0.0
      %v195 = vld [vmem:[%s185] sm:$0xff]
      %v196 = vld [vmem:[%s185 + $0x8] sm:$0xff]
      %v197 = vld [vmem:[%s185 + $0x10] sm:$0xff]
      %v198 = vld [vmem:[%s185 + $0x18] sm:$0xff]
      %v199 = vld [vmem:[%s185 + $0x20] sm:$0xff]
      %v200 = vld [vmem:[%s185 + $0x28] sm:$0xff]
      %v201 = vld [vmem:[%s185 + $0x30] sm:$0xff]
      %v202 = vld [vmem:[%s185 + $0x38] sm:$0xff]
      %v203 = vpack.c.bf16 %v196, %v195
      %v204 = vpack.c.bf16 %v198, %v197
      %v205 = vpack.c.bf16 %v200, %v199
      %v206 = vpack.c.bf16 %v202, %v201
      loop: start=0, step=1, limit=8
      $region33: #{seq_copy_generator_forward.5} parent=31 // loop_pre_header
        _
      $region34: #{seq_copy_generator_forward.5} parent=31 // loop_header
        %s208 = sphi 0, %s212
        %p209 = scmp.ge.s32.totalorder %s208, 8
      $region35: #{seq_copy_generator_forward.5} parent=31 // loop_header_branch
        %211 = sbr.rel (%p209) target = $region39
      $region36: #{seq_copy_generator_forward.5} parent=31 // loop_body
        %p213 = scmp.eq.s32.totalorder %s14, 0
        %s214 = ssub.s32 7, %s208
        %s215 = scalar_select %p213, %s208, %s214
        %v216 = vld [vmem:[#allocation2] sm:$0x3]
        %v217 = vld [vmem:[#allocation3] sm:$0x3]
        %v218 = vpack.c.bf16 %v216, %v216
        %s219 = smul.u32 %s215, 8
        %s220 = scalar_lea.vmem %s180, %s219
        %v221 = vld [vmem:[%s220] sm:$0x3]
        %v222 = vld [vmem:[%s220 + $0x2] sm:$0x3]
        %v223 = vld [vmem:[%s220 + $0x4] sm:$0x3]
        %v224 = vld [vmem:[%s220 + $0x6] sm:$0x3]
        %vm225 = vcmask 130048
        %v227 = vsel %vm225, %v218, 0
        %229 = vmatprep.subr.bf16.mxu0 0
        %230 = vmatpush1.bf16.msra.mxu0 %v203
        %231 = vmatprep.subr.bf16.mxu0 0
        %232 = vmatpush1.bf16.msra.mxu0 0
        %233 = vmatprep.subr.bf16.mxu0 0
        %234 = vmatpush1.bf16.msra.mxu0 0
        %235 = vmatprep.subr.bf16.mxu0 0
        %236 = vmatpush1.bf16.msra.mxu0 0
        %237 = vmatprep.subr.bf16.mxu0 0
        %238 = vmatpush1.bf16.msra.mxu0 0
        %239 = vmatprep.subr.bf16.mxu0 0
        %240 = vmatpush1.bf16.msra.mxu0 0
        %241 = vmatprep.subr.bf16.mxu0 0
        %242 = vmatpush1.bf16.msra.mxu0 0
        %243 = vmatprep.subr.bf16.mxu0 0
        %244 = vmatpush1.bf16.msra.mxu0 0
        %245 = vmatprep.subr.bf16.mxu0 0
        %246 = vmatpush1.bf16.msra.mxu0 0
        %247 = vmatprep.subr.bf16.mxu0 0
        %248 = vmatpush1.bf16.msra.mxu0 0
        %249 = vmatprep.subr.bf16.mxu0 0
        %250 = vmatpush1.bf16.msra.mxu0 0
        %251 = vmatprep.subr.bf16.mxu0 0
        %252 = vmatpush1.bf16.msra.mxu0 0
        %253 = vmatprep.subr.bf16.mxu0 0
        %254 = vmatpush1.bf16.msra.mxu0 0
        %255 = vmatprep.subr.bf16.mxu0 0
        %256 = vmatpush1.bf16.msra.mxu0 0
        %257 = vmatprep.subr.bf16.mxu0 0
        %258 = vmatpush1.bf16.msra.mxu0 0
        %259 = vmatprep.subr.bf16.mxu0 0
        %260 = vmatpush1.bf16.msra.mxu0 0
        %261 = vmatprep.mubr.bf16.mxu0 0
        %262 = vmatmul.mubr.bf16.gmra.mrb[0].mxu0 %v227
        %v263 = vpop.f32.mrb[0].mxu0
        %v264 = vadd.f32 0.0, %v263
        %v265 = vpop.f32.mrb[0].mxu0
        %v266 = vpop.f32.mrb[0].mxu0
        %v267 = vpop.f32.mrb[0].mxu0
        %268 = vdwg.mxu0
        %v269 = vadd.f32 %v221, %v264
        %270 = vmatprep.subr.bf16.mxu0 0
        %271 = vmatpush1.bf16.msra.mxu0 %v204
        %272 = vmatprep.subr.bf16.mxu0 0
        %273 = vmatpush1.bf16.msra.mxu0 0
        %274 = vmatprep.subr.bf16.mxu0 0
        %275 = vmatpush1.bf16.msra.mxu0 0
        %276 = vmatprep.subr.bf16.mxu0 0
        %277 = vmatpush1.bf16.msra.mxu0 0
        %278 = vmatprep.subr.bf16.mxu0 0
        %279 = vmatpush1.bf16.msra.mxu0 0
        %280 = vmatprep.subr.bf16.mxu0 0
        %281 = vmatpush1.bf16.msra.mxu0 0
        %282 = vmatprep.subr.bf16.mxu0 0
        %283 = vmatpush1.bf16.msra.mxu0 0
        %284 = vmatprep.subr.bf16.mxu0 0
        %285 = vmatpush1.bf16.msra.mxu0 0
        %286 = vmatprep.subr.bf16.mxu0 0
        %287 = vmatpush1.bf16.msra.mxu0 0
        %288 = vmatprep.subr.bf16.mxu0 0
        %289 = vmatpush1.bf16.msra.mxu0 0
        %290 = vmatprep.subr.bf16.mxu0 0
        %291 = vmatpush1.bf16.msra.mxu0 0
        %292 = vmatprep.subr.bf16.mxu0 0
        %293 = vmatpush1.bf16.msra.mxu0 0
        %294 = vmatprep.subr.bf16.mxu0 0
        %295 = vmatpush1.bf16.msra.mxu0 0
        %296 = vmatprep.subr.bf16.mxu0 0
        %297 = vmatpush1.bf16.msra.mxu0 0
        %298 = vmatprep.subr.bf16.mxu0 0
        %299 = vmatpush1.bf16.msra.mxu0 0
        %300 = vmatprep.subr.bf16.mxu0 0
        %301 = vmatpush1.bf16.msra.mxu0 0
        %302 = vmatprep.mubr.bf16.mxu0 0
        %303 = vmatmul.mubr.bf16.gmra.mrb[0].mxu0 %v227
        %v304 = vpop.f32.mrb[0].mxu0
        %v305 = vadd.f32 0.0, %v304
        %v306 = vpop.f32.mrb[0].mxu0
        %v307 = vpop.f32.mrb[0].mxu0
        %v308 = vpop.f32.mrb[0].mxu0
        %309 = vdwg.mxu0
        %v310 = vadd.f32 %v222, %v305
        %311 = vmatprep.subr.bf16.mxu0 0
        %312 = vmatpush1.bf16.msra.mxu0 %v205
        %313 = vmatprep.subr.bf16.mxu0 0
        %314 = vmatpush1.bf16.msra.mxu0 0
        %315 = vmatprep.subr.bf16.mxu0 0
        %316 = vmatpush1.bf16.msra.mxu0 0
        %317 = vmatprep.subr.bf16.mxu0 0
        %318 = vmatpush1.bf16.msra.mxu0 0
        %319 = vmatprep.subr.bf16.mxu0 0
        %320 = vmatpush1.bf16.msra.mxu0 0
        %321 = vmatprep.subr.bf16.mxu0 0
        %322 = vmatpush1.bf16.msra.mxu0 0
        %323 = vmatprep.subr.bf16.mxu0 0
        %324 = vmatpush1.bf16.msra.mxu0 0
        %325 = vmatprep.subr.bf16.mxu0 0
        %326 = vmatpush1.bf16.msra.mxu0 0
        %327 = vmatprep.subr.bf16.mxu0 0
        %328 = vmatpush1.bf16.msra.mxu0 0
        %329 = vmatprep.subr.bf16.mxu0 0
        %330 = vmatpush1.bf16.msra.mxu0 0
        %331 = vmatprep.subr.bf16.mxu0 0
        %332 = vmatpush1.bf16.msra.mxu0 0
        %333 = vmatprep.subr.bf16.mxu0 0
        %334 = vmatpush1.bf16.msra.mxu0 0
        %335 = vmatprep.subr.bf16.mxu0 0
        %336 = vmatpush1.bf16.msra.mxu0 0
        %337 = vmatprep.subr.bf16.mxu0 0
        %338 = vmatpush1.bf16.msra.mxu0 0
        %339 = vmatprep.subr.bf16.mxu0 0
        %340 = vmatpush1.bf16.msra.mxu0 0
        %341 = vmatprep.subr.bf16.mxu0 0
        %342 = vmatpush1.bf16.msra.mxu0 0
        %343 = vmatprep.mubr.bf16.mxu0 0
        %344 = vmatmul.mubr.bf16.gmra.mrb[0].mxu0 %v227
        %v345 = vpop.f32.mrb[0].mxu0
        %v346 = vadd.f32 0.0, %v345
        %v347 = vpop.f32.mrb[0].mxu0
        %v348 = vpop.f32.mrb[0].mxu0
        %v349 = vpop.f32.mrb[0].mxu0
        %350 = vdwg.mxu0
        %v351 = vadd.f32 %v223, %v346
        %352 = vmatprep.subr.bf16.mxu0 0
        %353 = vmatpush1.bf16.msra.mxu0 %v206
        %354 = vmatprep.subr.bf16.mxu0 0
        %355 = vmatpush1.bf16.msra.mxu0 0
        %356 = vmatprep.subr.bf16.mxu0 0
        %357 = vmatpush1.bf16.msra.mxu0 0
        %358 = vmatprep.subr.bf16.mxu0 0
        %359 = vmatpush1.bf16.msra.mxu0 0
        %360 = vmatprep.subr.bf16.mxu0 0
        %361 = vmatpush1.bf16.msra.mxu0 0
        %362 = vmatprep.subr.bf16.mxu0 0
        %363 = vmatpush1.bf16.msra.mxu0 0
        %364 = vmatprep.subr.bf16.mxu0 0
        %365 = vmatpush1.bf16.msra.mxu0 0
        %366 = vmatprep.subr.bf16.mxu0 0
        %367 = vmatpush1.bf16.msra.mxu0 0
        %368 = vmatprep.subr.bf16.mxu0 0
        %369 = vmatpush1.bf16.msra.mxu0 0
        %370 = vmatprep.subr.bf16.mxu0 0
        %371 = vmatpush1.bf16.msra.mxu0 0
        %372 = vmatprep.subr.bf16.mxu0 0
        %373 = vmatpush1.bf16.msra.mxu0 0
        %374 = vmatprep.subr.bf16.mxu0 0
        %375 = vmatpush1.bf16.msra.mxu0 0
        %376 = vmatprep.subr.bf16.mxu0 0
        %377 = vmatpush1.bf16.msra.mxu0 0
        %378 = vmatprep.subr.bf16.mxu0 0
        %379 = vmatpush1.bf16.msra.mxu0 0
        %380 = vmatprep.subr.bf16.mxu0 0
        %381 = vmatpush1.bf16.msra.mxu0 0
        %382 = vmatprep.subr.bf16.mxu0 0
        %383 = vmatpush1.bf16.msra.mxu0 0
        %384 = vmatprep.mubr.bf16.mxu0 0
        %385 = vmatmul.mubr.bf16.gmra.mrb[0].mxu0 %v227
        %v386 = vpop.f32.mrb[0].mxu0
        %v387 = vadd.f32 0.0, %v386
        %v388 = vpop.f32.mrb[0].mxu0
        %v389 = vpop.f32.mrb[0].mxu0
        %v390 = vpop.f32.mrb[0].mxu0
        %391 = vdwg.mxu0
        %v392 = vadd.f32 %v224, %v387
        %v393 = vxor.u32 %v269, 2147483648
        %v394 = vmul.f32 %v393, 1.442695
        %v395 = vpow.pop %v394
        %v396 = vadd.f32 %v395, 1.0
        %v397 = vrcp.pop %v396
        %v398 = vmul.f32 1.0, %v397
        %v399 = vxor.u32 %v310, 2147483648
        %v400 = vmul.f32 %v399, 1.442695
        %v401 = vpow.pop %v400
        %v402 = vadd.f32 %v401, 1.0
        %v403 = vrcp.pop %v402
        %v404 = vmul.f32 1.0, %v403
        %v405 = vtanh.pop %v351
        %v406 = vxor.u32 %v392, 2147483648
        %v407 = vmul.f32 %v406, 1.442695
        %v408 = vpow.pop %v407
        %v409 = vadd.f32 %v408, 1.0
        %v410 = vrcp.pop %v409
        %v411 = vmul.f32 1.0, %v410
        %v412 = vmul.f32 %v404, %v217
        %v413 = vmul.f32 %v398, %v405
        %v414 = vadd.f32 %v412, %v413
        %v415 = vtanh.pop %v414
        %v416 = vmul.f32 %v411, %v415
        %s417 = smul.u32 %s215, 2
        %s418 = scalar_lea.vmem %s1, %s417
        %v419 = vld [vmem:[%s418] sm:$0x3]
        %421 = vset.pattern.permute.xlu0 0
        %422 = vperm.xlu0 %421, %v419
        %v423 = vpop.permute.xlu0 %422
        %v425 = vmul.f32 %v423, %v416
        %v426 = vsub.f32 1.0, %v419
        %428 = vset.pattern.permute.xlu0 0
        %429 = vperm.xlu0 %428, %v426
        %v430 = vpop.permute.xlu0 %429
        %v432 = vmul.f32 %v430, %v216
        %v433 = vadd.f32 %v425, %v432
        %v434 = vmul.f32 %v423, %v414
        %v435 = vmul.f32 %v430, %v217
        %v436 = vadd.f32 %v434, %v435
        %437 = vst.msk [vmem:[#allocation2] sm:$0x3] %vm192, %v433
        %438 = vst.msk [vmem:[#allocation3] sm:$0x3] %vm192, %v436
        %s439 = scalar_lea.vmem %s190, %s417
        %440 = vst.msk [vmem:[%s439] sm:$0x3] %vm192, %v433
      $region37: #{seq_copy_generator_forward.5} parent=31 // loop_footer
        %s212 = sadd.s32 1, %s208
      $region38: #{seq_copy_generator_forward.5} parent=31 // loop_footer_branch
        %207 = sbr.rel target = $region34
      $region39: #{seq_copy_generator_forward.5} parent=31 // loop_exit
        _
      %p441 = scmp.lt.s32.totalorder %s14, 1
      %s442 = scalar_select %p441, %s14, 1
      %s443 = smul.addr %s442, 8
      %s444 = smul.addr %s443, 2
      %s445 = scalar_lea.vmem %s3, %s444
      // Predicated region
      $region40: #{seq_copy_generator_forward.5} parent=31 // pred_check
        %p446 = pneg %p105
      $region41: #{seq_copy_generator_forward.5} parent=31 // pred_check_branch
        %448 = sbr.rel (%p446) target = $region43
      $region42: #{seq_copy_generator_forward.5} parent=31 // pred_region
        _
      $region43: #{seq_copy_generator_forward.5} parent=31 // pred_fallthru
        _
    $region32: #{seq_copy_generator_forward.5} parent=5 // pred_fallthru
      _
    %p449 = scmp.le.s32.totalorder 2, %s9
    // Predicated region
    $region44: #{seq_copy_generator_forward.5} parent=5 // pred_check
      %p450 = pneg %p449
    $region45: #{seq_copy_generator_forward.5} parent=5 // pred_check_branch
      %452 = sbr.rel (%p450) target = $region47
    $region46: #{seq_copy_generator_forward.5} parent=5 // pred_region
      %s453 = ssub.s32 %s9, 2
      // Predicated region
      $region48: #{seq_copy_generator_forward.5} parent=46 // pred_check
        %p454 = pneg %p111
      $region49: #{seq_copy_generator_forward.5} parent=46 // pred_check_branch
        %456 = sbr.rel (%p454) target = $region51
      $region50: #{seq_copy_generator_forward.5} parent=46 // pred_region
        %p457 = scmp.lt.s32.totalorder %s15, 1
        %s458 = scalar_select %p457, %s15, 1
        %s459 = smul.addr %s458, 8
        %s460 = smul.addr %s459, 2
        %s461 = scalar_lea.vmem %s3, %s460
      $region51: #{seq_copy_generator_forward.5} parent=46 // pred_fallthru
        _
    $region47: #{seq_copy_generator_forward.5} parent=5 // pred_fallthru
      _
  $region6: #{seq_copy_generator_forward.5} parent=0 // loop_footer
    %s13 = sadd.s32 1, %s9
  $region7: #{seq_copy_generator_forward.5} parent=0 // loop_footer_branch
    %8 = sbr.rel target = $region3
  $region8: #{seq_copy_generator_forward.5} parent=0 // loop_exit
    _

// kernel: seq_copy_generator_forward.6
$region0: #{seq_copy_generator_forward.6}
  #allocation0 [shape = 'u32[]', space=smem, size = 0x4, offset = 0x4, fixed_abs, tag = 'smem constant byte address 0x4 - core index']
  #allocation1 [shape = 'u32[144,128]{1,0:T(1,128)}', space=vmem, size = 0x12000, scoped, tag = 'internal scratch']
  #allocation2 [shape = 'f32[8,1]{1,0:T(8,128)}', space=vmem, size = 0x1000, scoped, tag = 'scratch operand']
  #allocation3 [shape = 'f32[8,1]{1,0:T(8,128)}', space=vmem, size = 0x1000, scoped, tag = 'scratch operand']
  #allocation4 [shape = 'f32[8,1]{1,0:T(8,128)}', space=vmem, size = 0x1000, scoped, tag = 'scratch operand']
  %s0 = inlined_call_operand.vmem [shape: f32[16,32], index: 0, kind: input, shape index: {}]
  %s1 = inlined_call_operand.vmem [shape: bf16[32,128], index: 1, kind: input, shape index: {}]
  %s2 = inlined_call_operand.vmem [shape: f32[1,128], index: 2, kind: input, shape index: {}]
  %s3 = inlined_call_operand.vmem [shape: bf16[32,160], index: 3, kind: input, shape index: {}]
  %s4 = inlined_call_operand.vmem [shape: f32[1,160], index: 4, kind: input, shape index: {}]
  %s5 = inlined_call_operand.hbm [shape: f32[16,128], index: 5, kind: output, shape index: {0}]
  %s6 = inlined_call_operand.vmem [shape: f32[16,128], index: 6, kind: output, shape index: {1}]
  %s7 = inlined_call_operand.vmem [shape: f32[16,1], index: 7, kind: output, shape index: {2}]
  %8 = xla_tuple %s5, %s6, %s7
  %s9 = sld [smem:[#allocation0]]
  $region85: #{seq_copy_generator_forward.6} parent=0
    _
  %s11 = ssub.s32 1, %s9
  %s12 = scalar_select 0, %s11, %s9
  $region1: #{seq_copy_generator_forward.6} parent=0
    #allocation5 [shape = 'u8[8192]{0}', space=vmem, size = 0x2000, scoped, tag = 'output window, operand 0']
    #allocation6 [shape = 's32[2]{0}', space=sflag, size = 0x8, scoped, tag = 'scoped memory for seq_copy_generator_forward.6']
    %13 = vsyncpa [#allocation6], 0
    %s14 = scalar_lea.sflag [#allocation6], 1
    %15 = vsyncpa %s14, 0
    loop: start=0, step=1, limit=4
    $region2: #{seq_copy_generator_forward.6} parent=1 // loop_pre_header
      _
    $region3: #{seq_copy_generator_forward.6} parent=1 // loop_header
      %s17 = sphi 0, %s21
      %p18 = scmp.ge.s32.totalorder %s17, 4
      %s24 = sphi 0, %s36
      %s25 = sphi 0, %s32
      %s26 = sphi 0, %s24
      %s27 = sphi 0, %s25
      %s28 = sphi 0, %s26
      %s29 = sphi 0, %s27
      %s39 = sphi 0, %s41
      %s42 = sphi 0, %s39
      %s43 = sphi 0, %s42
      %s59 = sphi 0, %s43
      %s65 = sphi 0, %s67
      %s68 = sphi 0, %s65
      %s69 = sphi 0, %s68
      %s85 = sphi 0, %s69
      %s91 = sphi 0, %s93
      %s94 = sphi 0, %s91
      %s95 = sphi 0, %s94
      %s111 = sphi 0, %s95
      %s115 = sphi 0, %s115
      %s117 = sphi 0, %s115
      %s118 = sphi 0, %s117
      %s132 = sphi 0, %s118
      %s136 = sphi 0, %s136
      %s138 = sphi 0, %s136
      %s139 = sphi 0, %s138
      %s153 = sphi 0, %s139
      %s159 = sphi 0, %s161
      %s162 = sphi 0, %s159
      %s163 = sphi 0, %s162
      %s179 = sphi 0, %s163
      %s187 = sphi 0, %s189
      %s190 = sphi 0, %s187
      %s191 = sphi 0, %s190
      %s207 = sphi 0, %s191
      %s213 = sphi 0, %s215
      %s216 = sphi 0, %s213
      %s217 = sphi 0, %s216
      %s233 = sphi 0, %s217
    $region4: #{seq_copy_generator_forward.6} parent=1 // loop_header_branch
      %20 = sbr.rel (%p18) target = $region8
    $region5: #{seq_copy_generator_forward.6} parent=1 // loop_body
      %s22 = ssub.s32 %s17, 1
      %s23 = ssub.s32 %s17, 2
      %s30 = sadd.s32 1, %s25
      %p31 = scmp.ge.s32.totalorder %s30, 1
      %s32 = scalar_select %p31, 0, %s30
      %s33 = sadd.s32 1, %s24
      %s34 = scalar_select %p31, %s33, %s24
      %p35 = scmp.ge.s32.totalorder %s34, 2
      %s36 = scalar_select %p35, 0, %s34
      %s37 = ssub.s32 %s24, %s36
      %p38 = scmp.eq.s32.totalorder %s37, 0
      %s40 = sadd.s32 %s39, 1
      %s41 = scalar_select %p38, %s39, %s40
      %p44 = pneg %p38
      %p45 = scmp.eq.s32.totalorder %s17, 1
      %p46 = por %p44, %p45
      %p47 = scmp.ne.s32.totalorder %s39, %s42
      %p48 = scmp.eq.s32.totalorder %s17, 0
      %p49 = por %p47, %p48
      %p50 = scmp.ne.s32.totalorder %s39, %s42
      %p51 = scmp.eq.s32.totalorder %s22, 1
      %p52 = por %p50, %p51
      %p53 = scmp.ne.s32.totalorder %s42, %s43
      %p54 = scmp.eq.s32.totalorder %s22, 0
      %p55 = por %p53, %p54
      %p56 = scmp.ne.s32.totalorder %s42, %s43
      %p57 = scmp.eq.s32.totalorder %s23, 1
      %p58 = por %p56, %p57
      %p60 = scmp.ne.s32.totalorder %s43, %s59
      %p61 = scmp.eq.s32.totalorder %s23, 0
      %p62 = por %p60, %p61
      %s63 = ssub.s32 %s25, %s32
      %p64 = scmp.eq.s32.totalorder %s63, 0
      %s66 = sadd.s32 %s65, 1
      %s67 = scalar_select %p64, %s65, %s66
      %p70 = pneg %p64
      %p71 = scmp.eq.s32.totalorder %s17, 1
      %p72 = por %p70, %p71
      %p73 = scmp.ne.s32.totalorder %s65, %s68
      %p74 = scmp.eq.s32.totalorder %s17, 0
      %p75 = por %p73, %p74
      %p76 = scmp.ne.s32.totalorder %s65, %s68
      %p77 = scmp.eq.s32.totalorder %s22, 1
      %p78 = por %p76, %p77
      %p79 = scmp.ne.s32.totalorder %s68, %s69
      %p80 = scmp.eq.s32.totalorder %s22, 0
      %p81 = por %p79, %p80
      %p82 = scmp.ne.s32.totalorder %s68, %s69
      %p83 = scmp.eq.s32.totalorder %s23, 1
      %p84 = por %p82, %p83
      %p86 = scmp.ne.s32.totalorder %s69, %s85
      %p87 = scmp.eq.s32.totalorder %s23, 0
      %p88 = por %p86, %p87
      %s89 = ssub.s32 %s25, %s32
      %p90 = scmp.eq.s32.totalorder %s89, 0
      %s92 = sadd.s32 %s91, 1
      %s93 = scalar_select %p90, %s91, %s92
      %p96 = pneg %p90
      %p97 = scmp.eq.s32.totalorder %s17, 1
      %p98 = por %p96, %p97
      %p99 = scmp.ne.s32.totalorder %s91, %s94
      %p100 = scmp.eq.s32.totalorder %s17, 0
      %p101 = por %p99, %p100
      %p102 = scmp.ne.s32.totalorder %s91, %s94
      %p103 = scmp.eq.s32.totalorder %s22, 1
      %p104 = por %p102, %p103
      %p105 = scmp.ne.s32.totalorder %s94, %s95
      %p106 = scmp.eq.s32.totalorder %s22, 0
      %p107 = por %p105, %p106
      %p108 = scmp.ne.s32.totalorder %s94, %s95
      %p109 = scmp.eq.s32.totalorder %s23, 1
      %p110 = por %p108, %p109
      %p112 = scmp.ne.s32.totalorder %s95, %s111
      %p113 = scmp.eq.s32.totalorder %s23, 0
      %p114 = por %p112, %p113
      %s116 = sadd.s32 %s115, 1
      %p119 = scmp.eq.s32.totalorder %s17, 1
      %p120 = scmp.ne.s32.totalorder %s115, %s117
      %p121 = scmp.eq.s32.totalorder %s17, 0
      %p122 = por %p120, %p121
      %p123 = scmp.ne.s32.totalorder %s115, %s117
      %p124 = scmp.eq.s32.totalorder %s22, 1
      %p125 = por %p123, %p124
      %p126 = scmp.ne.s32.totalorder %s117, %s118
      %p127 = scmp.eq.s32.totalorder %s22, 0
      %p128 = por %p126, %p127
      %p129 = scmp.ne.s32.totalorder %s117, %s118
      %p130 = scmp.eq.s32.totalorder %s23, 1
      %p131 = por %p129, %p130
      %p133 = scmp.ne.s32.totalorder %s118, %s132
      %p134 = scmp.eq.s32.totalorder %s23, 0
      %p135 = por %p133, %p134
      %s137 = sadd.s32 %s136, 1
      %p140 = scmp.eq.s32.totalorder %s17, 1
      %p141 = scmp.ne.s32.totalorder %s136, %s138
      %p142 = scmp.eq.s32.totalorder %s17, 0
      %p143 = por %p141, %p142
      %p144 = scmp.ne.s32.totalorder %s136, %s138
      %p145 = scmp.eq.s32.totalorder %s22, 1
      %p146 = por %p144, %p145
      %p147 = scmp.ne.s32.totalorder %s138, %s139
      %p148 = scmp.eq.s32.totalorder %s22, 0
      %p149 = por %p147, %p148
      %p150 = scmp.ne.s32.totalorder %s138, %s139
      %p151 = scmp.eq.s32.totalorder %s23, 1
      %p152 = por %p150, %p151
      %p154 = scmp.ne.s32.totalorder %s139, %s153
      %p155 = scmp.eq.s32.totalorder %s23, 0
      %p156 = por %p154, %p155
      %s157 = ssub.s32 %s24, %s36
      %p158 = scmp.eq.s32.totalorder %s157, 0
      %s160 = sadd.s32 %s159, 1
      %s161 = scalar_select %p158, %s159, %s160
      %p164 = pneg %p158
      %p165 = scmp.eq.s32.totalorder %s17, 1
      %p166 = por %p164, %p165
      %p167 = scmp.ne.s32.totalorder %s159, %s162
      %p168 = scmp.eq.s32.totalorder %s17, 0
      %p169 = por %p167, %p168
      %p170 = scmp.ne.s32.totalorder %s159, %s162
      %p171 = scmp.eq.s32.totalorder %s22, 1
      %p172 = por %p170, %p171
      %p173 = scmp.ne.s32.totalorder %s162, %s163
      %p174 = scmp.eq.s32.totalorder %s22, 0
      %p175 = por %p173, %p174
      %p176 = scmp.ne.s32.totalorder %s162, %s163
      %p177 = scmp.eq.s32.totalorder %s23, 1
      %p178 = por %p176, %p177
      %p180 = scmp.ne.s32.totalorder %s163, %s179
      %p181 = scmp.eq.s32.totalorder %s23, 0
      %p182 = por %p180, %p181
      %s183 = ssub.s32 %s24, %s36
      %s184 = ssub.s32 %s25, %s32
      %s185 = sor.u32 %s183, %s184
      %p186 = scmp.eq.s32.totalorder %s185, 0
      %s188 = sadd.s32 %s187, 1
      %s189 = scalar_select %p186, %s187, %s188
      %p192 = pneg %p186
      %p193 = scmp.eq.s32.totalorder %s17, 1
      %p194 = por %p192, %p193
      %p195 = scmp.ne.s32.totalorder %s187, %s190
      %p196 = scmp.eq.s32.totalorder %s17, 0
      %p197 = por %p195, %p196
      %p198 = scmp.ne.s32.totalorder %s187, %s190
      %p199 = scmp.eq.s32.totalorder %s22, 1
      %p200 = por %p198, %p199
      %p201 = scmp.ne.s32.totalorder %s190, %s191
      %p202 = scmp.eq.s32.totalorder %s22, 0
      %p203 = por %p201, %p202
      %p204 = scmp.ne.s32.totalorder %s190, %s191
      %p205 = scmp.eq.s32.totalorder %s23, 1
      %p206 = por %p204, %p205
      %p208 = scmp.ne.s32.totalorder %s191, %s207
      %p209 = scmp.eq.s32.totalorder %s23, 0
      %p210 = por %p208, %p209
      %s211 = ssub.s32 %s24, %s36
      %p212 = scmp.eq.s32.totalorder %s211, 0
      %s214 = sadd.s32 %s213, 1
      %s215 = scalar_select %p212, %s213, %s214
      %p218 = pneg %p212
      %p219 = scmp.eq.s32.totalorder %s17, 1
      %p220 = por %p218, %p219
      %p221 = scmp.ne.s32.totalorder %s213, %s216
      %p222 = scmp.eq.s32.totalorder %s17, 0
      %p223 = por %p221, %p222
      %p224 = scmp.ne.s32.totalorder %s213, %s216
      %p225 = scmp.eq.s32.totalorder %s22, 1
      %p226 = por %p224, %p225
      %p227 = scmp.ne.s32.totalorder %s216, %s217
      %p228 = scmp.eq.s32.totalorder %s22, 0
      %p229 = por %p227, %p228
      %p230 = scmp.ne.s32.totalorder %s216, %s217
      %p231 = scmp.eq.s32.totalorder %s23, 1
      %p232 = por %p230, %p231
      %p234 = scmp.ne.s32.totalorder %s217, %s233
      %p235 = scmp.eq.s32.totalorder %s23, 0
      %p236 = por %p234, %p235
      %p237 = scmp.le.s32.totalorder 1, %s17
      %p238 = scmp.lt.s32.totalorder %s17, 3
      %p239 = pnand %p237, %p238
      %p240 = pneg %p239
      // Predicated region
      $region9: #{seq_copy_generator_forward.6} parent=5 // pred_check
        _
      $region10: #{seq_copy_generator_forward.6} parent=5 // pred_check_branch
        %242 = sbr.rel (%p239) target = $region12
      $region11: #{seq_copy_generator_forward.6} parent=5 // pred_region
        %s243 = ssub.s32 %s17, 1
        // Predicated region
        $region13: #{seq_copy_generator_forward.6} parent=11 // pred_check
          %p244 = pneg %p81
        $region14: #{seq_copy_generator_forward.6} parent=11 // pred_check_branch
          %246 = sbr.rel (%p244) target = $region16
        $region15: #{seq_copy_generator_forward.6} parent=11 // pred_region
          %p247 = scmp.lt.s32.totalorder %s27, 0
          %s248 = scalar_select %p247, %s27, 0
          %s249 = smul.addr %s248, 4
          %s250 = scalar_lea.vmem %s1, %s249
        $region16: #{seq_copy_generator_forward.6} parent=11 // pred_fallthru
          _
        // Predicated region
        $region17: #{seq_copy_generator_forward.6} parent=11 // pred_check
          %p251 = pneg %p107
        $region18: #{seq_copy_generator_forward.6} parent=11 // pred_check_branch
          %253 = sbr.rel (%p251) target = $region20
        $region19: #{seq_copy_generator_forward.6} parent=11 // pred_region
          %p254 = scmp.lt.s32.totalorder %s27, 0
          %s255 = scalar_select %p254, %s27, 0
          %s256 = scalar_lea.vmem %s2, %s255
        $region20: #{seq_copy_generator_forward.6} parent=11 // pred_fallthru
          _
        // Predicated region
        $region21: #{seq_copy_generator_forward.6} parent=11 // pred_check
          %p257 = pneg %p128
        $region22: #{seq_copy_generator_forward.6} parent=11 // pred_check_branch
          %259 = sbr.rel (%p257) target = $region24
        $region23: #{seq_copy_generator_forward.6} parent=11 // pred_region
          _
        $region24: #{seq_copy_generator_forward.6} parent=11 // pred_fallthru
          _
        // Predicated region
        $region25: #{seq_copy_generator_forward.6} parent=11 // pred_check
          %p260 = pneg %p149
        $region26: #{seq_copy_generator_forward.6} parent=11 // pred_check_branch
          %262 = sbr.rel (%p260) target = $region28
        $region27: #{seq_copy_generator_forward.6} parent=11 // pred_region
          _
        $region28: #{seq_copy_generator_forward.6} parent=11 // pred_fallthru
          _
      $region12: #{seq_copy_generator_forward.6} parent=5 // pred_fallthru
        _
      %p263 = scmp.lt.s32.totalorder %s17, 2
      // Predicated region
      $region29: #{seq_copy_generator_forward.6} parent=5 // pred_check
        %p264 = pneg %p263
      $region30: #{seq_copy_generator_forward.6} parent=5 // pred_check_branch
        %266 = sbr.rel (%p264) target = $region32
      $region31: #{seq_copy_generator_forward.6} parent=5 // pred_region
        // Predicated region
        $region33: #{seq_copy_generator_forward.6} parent=31 // pred_check
          %p267 = pneg %p49
        $region34: #{seq_copy_generator_forward.6} parent=31 // pred_check_branch
          %269 = sbr.rel (%p267) target = $region36
        $region35: #{seq_copy_generator_forward.6} parent=31 // pred_region
          %p270 = scmp.lt.s32.totalorder %s24, 1
          %s271 = scalar_select %p270, %s24, 1
          %s272 = smul.addr %s271, 8
          %s273 = scalar_lea.vmem %s0, %s272
        $region36: #{seq_copy_generator_forward.6} parent=31 // pred_fallthru
          _
      $region32: #{seq_copy_generator_forward.6} parent=5 // pred_fallthru
        _
      %p274 = scmp.le.s32.totalorder 1, %s17
      %p275 = scmp.lt.s32.totalorder %s17, 3
      %p276 = pnand %p274, %p275
      %p277 = pneg %p276
      // Predicated region
      $region37: #{seq_copy_generator_forward.6} parent=5 // pred_check
        _
      $region38: #{seq_copy_generator_forward.6} parent=5 // pred_check_branch
        %279 = sbr.rel (%p276) target = $region40
      $region39: #{seq_copy_generator_forward.6} parent=5 // pred_region
        %s280 = ssub.s32 %s17, 1
        %p281 = scmp.lt.s32.totalorder %s26, 1
        %s282 = scalar_select %p281, %s26, 1
        %s283 = smul.addr %s282, 8
        %s284 = scalar_lea.vmem %s0, %s283
        %p285 = pneg %p55
        %p286 = pneg %p52
        %p287 = scmp.lt.s32.totalorder %s27, 0
        %s288 = scalar_select %p287, %s27, 0
        %s289 = smul.addr %s288, 4
        %s290 = scalar_lea.vmem %s1, %s289
        %p291 = pneg %p81
        %p292 = pneg %p78
        %p293 = scmp.lt.s32.totalorder %s27, 0
        %s294 = scalar_select %p293, %s27, 0
        %s295 = scalar_lea.vmem %s2, %s294
        %p296 = pneg %p107
        %p297 = pneg %p104
        %p298 = pneg %p128
        %p299 = pneg %p125
        %p300 = pneg %p149
        %p301 = pneg %p146
        %p302 = pneg %p175
        %p303 = pneg %p172
        %s304 = sand.u32 %s162, 1
        %s305 = scalar_lea.sflag [#allocation6], %s304
        %s306 = sand.u32 %s162, 1
        %s307 = smul.addr %s306, 8
        %s308 = scalar_lea.vmem [#allocation5], %s307
        %p309 = pneg %p203
        %p310 = pneg %p200
        %p311 = scmp.lt.s32.totalorder %s26, 1
        %s312 = scalar_select %p311, %s26, 1
        %p313 = scmp.lt.s32.totalorder %s27, 0
        %s314 = scalar_select %p313, %s27, 0
        %s315 = sadd.s32 %s314, %s312
        %s316 = smul.addr %s315, 8
        %s317 = scalar_lea.vmem %s6, %s316
        %p318 = pneg %p229
        %p319 = pneg %p226
        %p320 = scmp.lt.s32.totalorder %s26, 1
        %s321 = scalar_select %p320, %s26, 1
        %s322 = smul.addr %s321, 8
        %s323 = scalar_lea.vmem %s7, %s322
        %p324 = scmp.lt.s32.totalorder %s26, 1
        %s325 = scalar_select %p324, %s26, 1
        %s326 = smul.addr %s325, 8
        %s327 = scalar_lea.vmem %s0, %s326
        %p328 = scmp.lt.s32.totalorder %s27, 0
        %s329 = scalar_select %p328, %s27, 0
        %s330 = smul.addr %s329, 4
        %s331 = scalar_lea.vmem %s1, %s330
        %p332 = scmp.lt.s32.totalorder %s27, 0
        %s333 = scalar_select %p332, %s27, 0
        %s334 = scalar_lea.vmem %s2, %s333
        %p335 = scmp.lt.s32.totalorder %s26, 1
        %s336 = scalar_select %p335, %s26, 1
        %p337 = scmp.lt.s32.totalorder %s27, 0
        %s338 = scalar_select %p337, %s27, 0
        %s339 = sadd.s32 %s338, %s336
        %s340 = smul.addr %s339, 8
        %s341 = scalar_lea.vmem %s6, %s340
        %p342 = scmp.lt.s32.totalorder %s26, 1
        %s343 = scalar_select %p342, %s26, 1
        %s344 = smul.addr %s343, 8
        %s345 = scalar_lea.vmem %s7, %s344
        %v347 = vld [vmem:[%s327] sm:$0xff]
        %v348 = vpack.c.bf16 %v347, %v347
        %v349 = vld [vmem:[%s331] sm:$0xf]
        %v350 = vld [vmem:[%s331 + $0x4] sm:$0xf]
        %v351 = vld [vmem:[%s331 + $0x8] sm:$0xf]
        %v352 = vld [vmem:[%s331 + $0xc] sm:$0xf]
        %v353 = vld [vmem:[%s334] sm:$0x1]
        %v355 = vlaneseq
        %v356 = vshrl.u32 %v355, 7
        %v357 = vsub.s32 0, %v356
        %v358 = vrot.slane %v353, %v357
        %v364 = vunpack.c.l.b16 %v349
        %v365 = vunpack.c.l.b16 %v350
        %v366 = vunpack.c.l.b16 %v351
        %v367 = vunpack.c.l.b16 %v352
        %v368 = vpack.c.b16 %v365, %v364
        %v369 = vpack.c.b16 %v367, %v366
        %vm372 = vcmask 261120
        %v374 = vsel %vm372, %v348, 0
        %376 = vmatprep.subr.bf16.mxu0 0
        %377 = vmatpush1.bf16.msra.mxu0 %v368
        %378 = vmatprep.subr.bf16.mxu0 0
        %379 = vmatpush1.bf16.msra.mxu0 %v369
        %380 = vmatprep.subr.bf16.mxu0 0
        %381 = vmatpush1.bf16.msra.mxu0 0
        %382 = vmatprep.subr.bf16.mxu0 0
        %383 = vmatpush1.bf16.msra.mxu0 0
        %384 = vmatprep.subr.bf16.mxu0 0
        %385 = vmatpush1.bf16.msra.mxu0 0
        %386 = vmatprep.subr.bf16.mxu0 0
        %387 = vmatpush1.bf16.msra.mxu0 0
        %388 = vmatprep.subr.bf16.mxu0 0
        %389 = vmatpush1.bf16.msra.mxu0 0
        %390 = vmatprep.subr.bf16.mxu0 0
        %391 = vmatpush1.bf16.msra.mxu0 0
        %392 = vmatprep.subr.bf16.mxu0 0
        %393 = vmatpush1.bf16.msra.mxu0 0
        %394 = vmatprep.subr.bf16.mxu0 0
        %395 = vmatpush1.bf16.msra.mxu0 0
        %396 = vmatprep.subr.bf16.mxu0 0
        %397 = vmatpush1.bf16.msra.mxu0 0
        %398 = vmatprep.subr.bf16.mxu0 0
        %399 = vmatpush1.bf16.msra.mxu0 0
        %400 = vmatprep.subr.bf16.mxu0 0
        %401 = vmatpush1.bf16.msra.mxu0 0
        %402 = vmatprep.subr.bf16.mxu0 0
        %403 = vmatpush1.bf16.msra.mxu0 0
        %404 = vmatprep.subr.bf16.mxu0 0
        %405 = vmatpush1.bf16.msra.mxu0 0
        %406 = vmatprep.subr.bf16.mxu0 0
        %407 = vmatpush1.bf16.msra.mxu0 0
        %408 = vmatprep.mubr.bf16.mxu0 0
        %409 = vmatmul.mubr.bf16.gmra.mrb[0].mxu0 %v374
        %v410 = vpop.f32.mrb[0].mxu0
        %v411 = vadd.f32 %v358, %v410
        %v412 = vpop.f32.mrb[0].mxu0
        %v413 = vpop.f32.mrb[0].mxu0
        %v414 = vpop.f32.mrb[0].mxu0
        %415 = vdwg.mxu0
        %p416 = scmp.eq.s32.totalorder %s27, 0
        // Predicated region
        $region41: #{seq_copy_generator_forward.6} parent=39 // pred_check
          %p417 = pneg %p416
        $region42: #{seq_copy_generator_forward.6} parent=39 // pred_check_branch
          %419 = sbr.rel (%p417) target = $region44
        $region43: #{seq_copy_generator_forward.6} parent=39 // pred_region
          %v420 = vld [vmem:[%s3] sm:$0xff]
          %v421 = vld [vmem:[%s3 + $0x8] sm:$0xff]
          %v422 = vld [vmem:[%s3 + $0x10] sm:$0xff]
          %v423 = vld [vmem:[%s3 + $0x18] sm:$0xff]
          %v424 = vld [vmem:[%s4] sm:$0x3]
          %v426 = vlaneseq
          %v427 = vshrl.u32 %v426, 7
          %v428 = vsub.s32 0, %v427
          %v429 = vrot.slane %v424, %v428
          %v430 = vlaneseq
          %v431 = vshrl.u32 %v430, 7
          %v432 = vsub.s32 1, %v431
          %v433 = vrot.slane %v424, %v432
          %v440 = vunpack.c.l.b16 %v420
          %v441 = vunpack.c.h.b16 %v420
          %v442 = vunpack.c.l.b16 %v421
          %v443 = vunpack.c.h.b16 %v421
          %v444 = vunpack.c.l.b16 %v422
          %v445 = vunpack.c.h.b16 %v422
          %v446 = vunpack.c.l.b16 %v423
          %v447 = vunpack.c.h.b16 %v423
          %v448 = vpack.c.b16 %v442, %v440
          %v449 = vpack.c.b16 %v443, %v441
          %v450 = vpack.c.b16 %v446, %v444
          %v451 = vpack.c.b16 %v447, %v445
          %456 = vmatprep.subr.bf16.mxu0 %v449
          %457 = vmatpush1.bf16.msra.mxu0 %v448
          %458 = vmatprep.subr.bf16.mxu0 %v451
          %459 = vmatpush1.bf16.msra.mxu0 %v450
          %460 = vmatprep.subr.bf16.mxu0 0
          %461 = vmatpush1.bf16.msra.mxu0 0
          %462 = vmatprep.subr.bf16.mxu0 0
          %463 = vmatpush1.bf16.msra.mxu0 0
          %464 = vmatprep.subr.bf16.mxu0 0
          %465 = vmatpush1.bf16.msra.mxu0 0
          %466 = vmatprep.subr.bf16.mxu0 0
          %467 = vmatpush1.bf16.msra.mxu0 0
          %468 = vmatprep.subr.bf16.mxu0 0
          %469 = vmatpush1.bf16.msra.mxu0 0
          %470 = vmatprep.subr.bf16.mxu0 0
          %471 = vmatpush1.bf16.msra.mxu0 0
          %472 = vmatprep.subr.bf16.mxu0 0
          %473 = vmatpush1.bf16.msra.mxu0 0
          %474 = vmatprep.subr.bf16.mxu0 0
          %475 = vmatpush1.bf16.msra.mxu0 0
          %476 = vmatprep.subr.bf16.mxu0 0
          %477 = vmatpush1.bf16.msra.mxu0 0
          %478 = vmatprep.subr.bf16.mxu0 0
          %479 = vmatpush1.bf16.msra.mxu0 0
          %480 = vmatprep.subr.bf16.mxu0 0
          %481 = vmatpush1.bf16.msra.mxu0 0
          %482 = vmatprep.subr.bf16.mxu0 0
          %483 = vmatpush1.bf16.msra.mxu0 0
          %484 = vmatprep.subr.bf16.mxu0 0
          %485 = vmatpush1.bf16.msra.mxu0 0
          %486 = vmatprep.subr.bf16.mxu0 0
          %487 = vmatpush1.bf16.msra.mxu0 0
          %488 = vmatprep.mubr.bf16.mxu0 0
          %489 = vmatmul.mubr.bf16.gmra.mrb[0].mxu0 %v374
          %v490 = vpop.f32.mrb[0].mxu0
          %v491 = vadd.f32 %v429, %v490
          %v492 = vpop.f32.mrb[0].mxu0
          %v493 = vadd.f32 %v433, %v492
          %v494 = vpop.f32.mrb[0].mxu0
          %v495 = vpop.f32.mrb[0].mxu0
          %496 = vdwg.mxu0
          %v497 = vmul.f32 %v493, %v347
          %v498 = vsel %vm372, %v497, 0.0
          %499 = vadd.xlane.f32.xlu0 %v498
          %v500 = vpop.xlane.xlu0 %499
          %vm501 = vcmask 7168
          %502 = vst.msk [vmem:[#allocation4] sm:$0xff] %vm501, %v500
          %503 = vmax.xlane.f32.xlu0 %v491
          %v504 = vpop.xlane.xlu0 %503
          %v505 = vsub.f32 %v491, %v504
          %v506 = vmul.f32 %v505, 1.442695
          %v507 = vpow.pop %v506
          %508 = vadd.xlane.f32.xlu0 %v507
          %v509 = vpop.xlane.xlu0 %508
          %v510 = vlog2.pop %v509
          %v511 = vmul.f32 %v510, 0.6931472
          %v512 = vsub.f32 %v505, %v511
          %v513 = vmax.f32 %v512, -27.631021
          %514 = vst [vmem:[%s308] sm:$0xff] %v513
          %515 = vmax.xlane.f32.xlu0 %v411
          %v516 = vpop.xlane.xlu0 %515
          %v517 = vmax.f32 %v516, %v500
          %v518 = vsub.f32 %v411, %v517
          %v519 = vmul.f32 %v518, 1.442695
          %v520 = vpow.pop %v519
          %521 = vadd.xlane.f32.xlu0 %v520
          %v522 = vpop.xlane.xlu0 %521
          %v523 = vsub.f32 %v500, %v517
          %v524 = vmul.f32 %v523, 1.442695
          %v525 = vpow.pop %v524
          %v526 = vadd.f32 %v522, %v525
          %527 = vst.msk [vmem:[#allocation3] sm:$0xff] %vm501, %v526
          %528 = vst.msk [vmem:[#allocation2] sm:$0xff] %vm501, %v517
        $region44: #{seq_copy_generator_forward.6} parent=39 // pred_fallthru
          _
        %p529 = scmp.gt.s32.totalorder %s27, 0
        // Predicated region
        $region45: #{seq_copy_generator_forward.6} parent=39 // pred_check
          %p530 = pneg %p529
        $region46: #{seq_copy_generator_forward.6} parent=39 // pred_check_branch
          %532 = sbr.rel (%p530) target = $region48
        $region47: #{seq_copy_generator_forward.6} parent=39 // pred_region
          %v533 = vld [vmem:[#allocation2] sm:$0xff]
          %534 = vmax.xlane.f32.xlu0 %v411
          %v535 = vpop.xlane.xlu0 %534
          %v536 = vmax.f32 %v533, %v535
          %v537 = vld [vmem:[#allocation3] sm:$0xff]
          %v538 = vsub.f32 %v533, %v536
          %v539 = vmul.f32 %v538, 1.442695
          %v540 = vpow.pop %v539
          %v541 = vmul.f32 %v537, %v540
          %543 = vset.pattern.permute.xlu0 0
          %544 = vperm.xlu0 %543, %v536
          %v545 = vpop.permute.xlu0 %544
          %v547 = vsub.f32 %v411, %v545
          %v548 = vmul.f32 %v547, 1.442695
          %v549 = vpow.pop %v548
          %550 = vadd.xlane.f32.xlu0 %v549
          %v551 = vpop.xlane.xlu0 %550
          %v552 = vadd.f32 %v541, %v551
          %vm553 = vcmask 7168
          %554 = vst.msk [vmem:[#allocation3] sm:$0xff] %vm553, %v552
          %555 = vst.msk [vmem:[#allocation2] sm:$0xff] %vm553, %v536
        $region48: #{seq_copy_generator_forward.6} parent=39 // pred_fallthru
          _
        %p556 = scmp.lt.s32.totalorder %s27, 0
        // Predicated region
        $region49: #{seq_copy_generator_forward.6} parent=39 // pred_check
          %p557 = pneg %p556
        $region50: #{seq_copy_generator_forward.6} parent=39 // pred_check_branch
          %559 = sbr.rel (%p557) target = $region52
        $region51: #{seq_copy_generator_forward.6} parent=39 // pred_region
          %560 = vst [vmem:[%s341] sm:$0xff] %v411
        $region52: #{seq_copy_generator_forward.6} parent=39 // pred_fallthru
          _
        // Predicated region
        $region53: #{seq_copy_generator_forward.6} parent=39 // pred_check
          %p561 = pneg %p416
        $region54: #{seq_copy_generator_forward.6} parent=39 // pred_check_branch
          %563 = sbr.rel (%p561) target = $region56
        $region55: #{seq_copy_generator_forward.6} parent=39 // pred_region
          %v564 = vlaneseq
          %v565 = vand.u32 %v564, 127
          %vm566 = vcmp.eq.s32.totalorder %v565, 64
          %v567 = vld [vmem:[#allocation4] sm:$0xff]
          %569 = vset.pattern.permute.xlu0 0
          %570 = vperm.xlu0 %569, %v567
          %v571 = vpop.permute.xlu0 %570
          %v573 = vsel %vm566, %v571, %v411
          %574 = vst [vmem:[%s341] sm:$0xff] %v573
          %v575 = vld [vmem:[#allocation2] sm:$0xff]
          %v576 = vld [vmem:[#allocation3] sm:$0xff]
          %v577 = vlog2.pop %v576
          %v578 = vmul.f32 %v577, 0.6931472
          %v579 = vadd.f32 %v575, %v578
          %vm580 = vcmask 7168
          %581 = vst.msk [vmem:[%s345] sm:$0xff] %vm580, %v579
        $region56: #{seq_copy_generator_forward.6} parent=39 // pred_fallthru
          _
        %s582 = sand.u32 %s162, 1
        %s583 = scalar_lea.sflag [#allocation6], %s582
        %s584 = sand.u32 %s162, 1
        %s585 = smul.addr %s584, 8
        %s586 = scalar_lea.vmem [#allocation5], %s585
        %p587 = scmp.lt.s32.totalorder %s26, 1
        %s588 = scalar_select %p587, %s26, 1
        %p589 = scmp.lt.s32.totalorder %s27, 0
        %s590 = scalar_select %p589, %s27, 0
        %s591 = sadd.s32 %s590, %s588
        %s592 = smul.addr %s591, 8
        %s593 = scalar_lea.vmem %s6, %s592
        %p594 = scmp.lt.s32.totalorder %s26, 1
        %s595 = scalar_select %p594, %s26, 1
        %s596 = smul.addr %s595, 8
        %s597 = scalar_lea.vmem %s7, %s596
        // Predicated region
        $region57: #{seq_copy_generator_forward.6} parent=39 // pred_check
          %p598 = pneg %p172
        $region58: #{seq_copy_generator_forward.6} parent=39 // pred_check_branch
          %600 = sbr.rel (%p598) target = $region60
        $region59: #{seq_copy_generator_forward.6} parent=39 // pred_region
          %s602 = ssub.s32 128, 128
          %603 = vsyncadd %s583, %s602
          %s604 = smul.addr %s26, 128
          %s605 = scalar_lea.hbm %s5, %s604
          %s607 = sshll.u32 %s586, 4
          %s608 = int_to_ptr.vmem [resolvable:$true] %s607
          %610 = dma.vmem_to_hbm [thread:$0]  %s608, 128, %s605, %s583
        $region60: #{seq_copy_generator_forward.6} parent=39 // pred_fallthru
          _
        // Predicated region
        $region61: #{seq_copy_generator_forward.6} parent=39 // pred_check
          %p611 = pneg %p200
        $region62: #{seq_copy_generator_forward.6} parent=39 // pred_check_branch
          %613 = sbr.rel (%p611) target = $region64
        $region63: #{seq_copy_generator_forward.6} parent=39 // pred_region
          _
        $region64: #{seq_copy_generator_forward.6} parent=39 // pred_fallthru
          _
        // Predicated region
        $region65: #{seq_copy_generator_forward.6} parent=39 // pred_check
          %p614 = pneg %p226
        $region66: #{seq_copy_generator_forward.6} parent=39 // pred_check_branch
          %616 = sbr.rel (%p614) target = $region68
        $region67: #{seq_copy_generator_forward.6} parent=39 // pred_region
          _
        $region68: #{seq_copy_generator_forward.6} parent=39 // pred_fallthru
          _
      $region40: #{seq_copy_generator_forward.6} parent=5 // pred_fallthru
        _
      %p617 = scmp.le.s32.totalorder 2, %s17
      // Predicated region
      $region69: #{seq_copy_generator_forward.6} parent=5 // pred_check
        %p618 = pneg %p617
      $region70: #{seq_copy_generator_forward.6} parent=5 // pred_check_branch
        %620 = sbr.rel (%p618) target = $region72
      $region71: #{seq_copy_generator_forward.6} parent=5 // pred_region
        %s621 = ssub.s32 %s17, 2
        // Predicated region
        $region73: #{seq_copy_generator_forward.6} parent=71 // pred_check
          %p622 = pneg %p178
        $region74: #{seq_copy_generator_forward.6} parent=71 // pred_check_branch
          %624 = sbr.rel (%p622) target = $region76
        $region75: #{seq_copy_generator_forward.6} parent=71 // pred_region
          %s625 = sand.u32 %s163, 1
          %s626 = scalar_lea.sflag [#allocation6], %s625
          %s627 = sand.u32 %s163, 1
          %s628 = smul.addr %s627, 8
          %s629 = scalar_lea.vmem [#allocation5], %s628
          %630 = dma.done %s626, 128
        $region76: #{seq_copy_generator_forward.6} parent=71 // pred_fallthru
          _
        // Predicated region
        $region77: #{seq_copy_generator_forward.6} parent=71 // pred_check
          %p631 = pneg %p206
        $region78: #{seq_copy_generator_forward.6} parent=71 // pred_check_branch
          %633 = sbr.rel (%p631) target = $region80
        $region79: #{seq_copy_generator_forward.6} parent=71 // pred_region
          %p634 = scmp.lt.s32.totalorder %s28, 1
          %s635 = scalar_select %p634, %s28, 1
          %p636 = scmp.lt.s32.totalorder %s29, 0
          %s637 = scalar_select %p636, %s29, 0
          %s638 = sadd.s32 %s637, %s635
          %s639 = smul.addr %s638, 8
          %s640 = scalar_lea.vmem %s6, %s639
        $region80: #{seq_copy_generator_forward.6} parent=71 // pred_fallthru
          _
        // Predicated region
        $region81: #{seq_copy_generator_forward.6} parent=71 // pred_check
          %p641 = pneg %p232
        $region82: #{seq_copy_generator_forward.6} parent=71 // pred_check_branch
          %643 = sbr.rel (%p641) target = $region84
        $region83: #{seq_copy_generator_forward.6} parent=71 // pred_region
          %p644 = scmp.lt.s32.totalorder %s28, 1
          %s645 = scalar_select %p644, %s28, 1
          %s646 = smul.addr %s645, 8
          %s647 = scalar_lea.vmem %s7, %s646
        $region84: #{seq_copy_generator_forward.6} parent=71 // pred_fallthru
          _
      $region72: #{seq_copy_generator_forward.6} parent=5 // pred_fallthru
        _
    $region6: #{seq_copy_generator_forward.6} parent=1 // loop_footer
      %s21 = sadd.s32 1, %s17
    $region7: #{seq_copy_generator_forward.6} parent=1 // loop_footer_branch
      %16 = sbr.rel target = $region3
    $region8: #{seq_copy_generator_forward.6} parent=1 // loop_exit
      _
    %648 = vsyncpa [#allocation6], 1
    %s649 = scalar_lea.sflag [#allocation6], 1
    %650 = vsyncpa %s649, 1

</llo_original>
